<compile_context>
chip_gen: v5e
topology: v5e:2x2
jax: 0.10.0
libtpu: 0.0.40
codegen_flags: <defaults>
</compile_context>

<pallas_src>
import math
from functools import partial

import jax
import jax.numpy as jnp
from jax.experimental import pallas as pl
from jax.experimental.pallas import tpu as pltpu


def _round_up(x, m):
    return ((x + m - 1) // m) * m


def _bf16_transcendentals_ok():
    """bf16 EUP/VPU exists on v6e / v7x; keep f32 elsewhere (v5e and older)."""
    try:
        kind = jax.devices()[0].device_kind.lower()
    except Exception:
        return False
    return ("v6" in kind) or ("v7" in kind) or ("7x" in kind)


# ----------------------------------------------------------------------------
# Pallas kernel 1: Transform.warp_coordinates (shared coordinate grid path)
#   out[b, n, :] = A_b @ coords[n] + t_b + sum_p d^2 * log(d + 1e-6) * cp_b[p]
#   d = |coords[n] - control_point[p]|_1 ; the TPS residual is added to both
#   x and y (matches the PyTorch broadcast of the size-1 last dim).
# The coordinate grid is batch-independent, so the radial basis is computed
# once per point tile and reused for every batch index.
# ----------------------------------------------------------------------------
_TPS_TILE_N = 2048  # points per tile -> (16, 128) lane-dense layout per component


def _warp_kernel(theta_ref, cp_ref, cpar_ref, xy_ref, out_ref, *, use_bf16_rbf):
    bs = out_ref.shape[0]
    P = cp_ref.shape[0] // 2

    x = xy_ref[0]                                  # (S, 128) lane-dense tile
    y = xy_ref[1]

    # Per-control-point FMA loop: live set stays ~(bs + few) vregs, the basis
    # is computed once and shared across all batch indices, scalar operands
    # come from SMEM (free broadcast on the scalar path).
    res = [jnp.zeros_like(x) for _ in range(bs)]
    for p in range(P):
        cpx = cp_ref[2 * p]
        cpy = cp_ref[2 * p + 1]
        d = jnp.abs(x - cpx) + jnp.abs(y - cpy)    # L1 distance, (S, 128)
        if use_bf16_rbf:
            # v6e/v7x: bf16 EUP log ~2x throughput on the dominant op.
            d16 = d.astype(jnp.bfloat16)
            rbf = (d16 * d16 * jnp.log(d16 + jnp.bfloat16(1e-6))).astype(jnp.float32)
        else:
            rbf = d * d * jnp.log(d + 1e-6)
        for b in range(bs):
            res[b] = res[b] + cpar_ref[b * P + p] * rbf

    for b in range(bs):
        a00 = theta_ref[b * 6 + 0]
        a01 = theta_ref[b * 6 + 1]
        t0 = theta_ref[b * 6 + 2]
        a10 = theta_ref[b * 6 + 3]
        a11 = theta_ref[b * 6 + 4]
        t1 = theta_ref[b * 6 + 5]
        out_ref[b, 0] = a00 * x + a01 * y + t0 + res[b]   # dense (S,128) stores
        out_ref[b, 1] = a10 * x + a11 * y + t1 + res[b]


def _warp_coordinates_ref(coords, theta, control_points, control_params):
    """Plain-JAX reference / small-N (keypoint) path."""
    bs = theta.shape[0]
    coords = jnp.broadcast_to(coords.astype(jnp.float32),
                              (bs,) + coords.shape[1:])             # (bs, N, 2)
    theta = theta.astype(jnp.float32)
    aff = jnp.einsum("bij,bnj->bni", theta[:, :, :2], coords)
    aff = aff + theta[:, :, 2][:, None, :]
    dist = jnp.abs(coords[:, :, None, :]
                   - control_points[None, None, :, :]).sum(-1)      # (bs, N, P)
    rbf = dist * dist * jnp.log(dist + 1e-6)
    res = (rbf * control_params[:, None, :]).sum(-1, keepdims=True)  # (bs, N, 1)
    return aff + res


def warp_coordinates_pallas(coords, theta, control_points, control_params,
                            tile_n=_TPS_TILE_N, use_bf16_rbf=None):
    """coords: (Bc, N, 2) with Bc in {1, bs}; returns (bs, N, 2) float32."""
    bs = theta.shape[0]
    Bc, N, _ = coords.shape
    P = control_points.shape[0]

    if use_bf16_rbf is None:
        use_bf16_rbf = _bf16_transcendentals_ok()

    # Tiny point counts (the 15 canonical keypoints) and per-batch coordinate
    # sets: launch/DMA overhead dominates -> plain-JAX path.
    # TODO(synk): per-batch large-N coordinate sets are not used by trainer.py
    # (transform_frame shares one coordinate grid), so they stay in JAX.
    if N < 128 or Bc != 1:
        return _warp_coordinates_ref(coords, theta, control_points, control_params)

    if bs > 8:
        tile_n = min(tile_n, 1024)      # keep bs accumulators inside the vreg file
    n_pad128 = _round_up(N, 128)
    if n_pad128 <= tile_n:
        tile_n = n_pad128               # single tile (full dim -> any S allowed)
        n_pad = n_pad128
    else:
        tile_n = _round_up(tile_n, 1024)  # S multiple of 8 for tiled case
        n_pad = _round_up(N, tile_n)
    S = tile_n // 128

    # Lane-dense coordinate slab: (2, n_pad/128, 128), x on row 0, y on row 1.
    xy = jnp.transpose(coords[0].astype(jnp.float32), (1, 0))        # (2, N)
    if n_pad != N:
        xy = jnp.pad(xy, ((0, 0), (0, n_pad - N)))
    xy = xy.reshape(2, n_pad // 128, 128)

    # Flat 1-D SMEM scalar operands (no 2-D SMEM padding, no VMEM lane bcasts).
    theta_flat = theta.reshape(bs * 6).astype(jnp.float32)
    cp_flat = control_points.reshape(P * 2).astype(jnp.float32)      # x0,y0,x1,...
    cpar_flat = control_params.reshape(bs * P).astype(jnp.float32)

    out = pl.pallas_call(
        partial(_warp_kernel, use_bf16_rbf=use_bf16_rbf),
        grid=(n_pad // tile_n,),
        in_specs=[
            pl.BlockSpec(memory_space=pltpu.MemorySpace.SMEM),       # theta
            pl.BlockSpec(memory_space=pltpu.MemorySpace.SMEM),       # ctrl points
            pl.BlockSpec(memory_space=pltpu.MemorySpace.SMEM),       # ctrl params
            pl.BlockSpec((2, S, 128), lambda t: (0, t, 0)),          # xy tile
        ],
        out_specs=pl.BlockSpec((bs, 2, S, 128), lambda t: (0, 0, t, 0)),
        out_shape=jax.ShapeDtypeStruct((bs, 2, n_pad // 128, 128), jnp.float32),
        compiler_params=pltpu.CompilerParams(
            dimension_semantics=("parallel",)),
    )(theta_flat, cp_flat, cpar_flat, xy)

    out = out.reshape(bs, 2, n_pad)[:, :, :N]
    return jnp.transpose(out, (0, 2, 1))                             # (bs, N, 2)


# ----------------------------------------------------------------------------
# Pallas kernel 2: Hopenet head-pose head (fused)
#   pooled(2048) @ W_cat(2048, 3*128 bf16) -> per-head softmax(66 bins padded
#   to 128 lanes with -1e30 bias) -> expectation -> (E - n_bins//2)*3*pi/180
# ----------------------------------------------------------------------------
_HEAD_PAD = 128  # per-head lane group (vreg aligned)


def _hopenet_head_kernel(n_bins, pooled_ref, w_ref, b_ref, out_ref):
    logits = jnp.dot(pooled_ref[...], w_ref[...],
                     preferred_element_type=jnp.float32) + b_ref[...]
    half = float(n_bins // 2)
    idx_c = jax.lax.broadcasted_iota(jnp.float32, (1, _HEAD_PAD), 1) - half
    scale = 3.0 * math.pi / 180.0
    cols = []
    for h in range(3):                                   # yaw, pitch, roll
        lg = logits[:, h * _HEAD_PAD:(h + 1) * _HEAD_PAD]
        m = jnp.max(lg, axis=1, keepdims=True)
        e = jnp.exp(lg - m)                              # padded bins -> 0.0
        s = jnp.sum(e, axis=1, keepdims=True)
        num = jnp.sum(e * idx_c, axis=1, keepdims=True)
        # sum(e*(idx-half))/sum(e) == E[idx] - half; approx reciprocal on the
        # otherwise-idle EUP slot instead of a VPU divide.
        cols.append(num * pl.reciprocal(s, approx=True) * scale)
    out_ref[...] = jnp.concatenate(cols, axis=1)         # single (tb, 3) store


def hopenet_head_pallas(feat, fused_params, n_bins=66, max_batch_tile=128):
    """feat: (B, 2048, 7, 7) layer4 features -> (yaw, pitch, roll) each (B,)."""
    B, Cf = feat.shape[0], feat.shape[1]
    # Pool in XLA glue: the kernel only DMAs (B, 2048) instead of (B, 49, 2048)
    # and no HBM transpose is materialized.
    pooled = feat.astype(jnp.float32).mean(axis=(2, 3)).astype(jnp.bfloat16)

    # Collapse to a single grid step for realistic B (grid steps are pure
    # ~0.35 us overhead for an 8x2048x384 matmul).
    tb = min(max_batch_tile, _round_up(B, 8))
    b_pad = _round_up(B, tb)
    if b_pad != B:
        pooled = jnp.pad(pooled, ((0, b_pad - B), (0, 0)))

    w_cat = fused_params["w_cat"]                        # (2048, 384) bf16
    b_cat = fused_params["b_cat"]                        # (1, 384) f32

    out = pl.pallas_call(
        partial(_hopenet_head_kernel, n_bins),
        grid=(b_pad // tb,),
        in_specs=[
            pl.BlockSpec((tb, Cf), lambda i: (i, 0)),
            pl.BlockSpec(w_cat.shape, lambda i: (0, 0)),   # resident weight
            pl.BlockSpec(b_cat.shape, lambda i: (0, 0)),
        ],
        out_specs=pl.BlockSpec((tb, 3), lambda i: (i, 0)),
        out_shape=jax.ShapeDtypeStruct((b_pad, 3), jnp.float32),
        compiler_params=pltpu.CompilerParams(
            dimension_semantics=("parallel",)),
    )(pooled, w_cat, b_cat)
    out = out[:B]
    return out[:, 0], out[:, 1], out[:, 2]


def _hopenet_head_ref(feat, fused_params, n_bins=66):
    pooled = feat.astype(jnp.float32).mean(axis=(2, 3))
    pooled = pooled.astype(jnp.bfloat16).astype(jnp.float32)
    w = fused_params["w_cat"].astype(jnp.float32)
    b = fused_params["b_cat"]
    logits = pooled @ w + b
    idx = jnp.arange(_HEAD_PAD, dtype=jnp.float32)
    outs = []
    for h in range(3):
        lg = logits[:, h * _HEAD_PAD:(h + 1) * _HEAD_PAD]
        p = jax.nn.softmax(lg, axis=1)
        e = (p * idx).sum(axis=1)
        outs.append((e - float(n_bins // 2)) * 3.0 * math.pi / 180.0)
    return tuple(outs)


# ----------------------------------------------------------------------------
# Plain-JAX glue: coordinate grid + grid_sample (reflection, align_corners=True)
# ----------------------------------------------------------------------------
def make_coordinate_grid_2d(h, w):
    x = 2.0 * (jnp.arange(w, dtype=jnp.float32) / float(w - 1)) - 1.0
    y = 2.0 * (jnp.arange(h, dtype=jnp.float32) / float(h - 1)) - 1.0
    xx = jnp.tile(x[None, :], (h, 1))
    yy = jnp.tile(y[:, None], (1, w))
    return jnp.stack([xx, yy], axis=2)  # (h, w, 2), order (x, y)


def _reflect(v, size):
    if size == 1:
        return jnp.zeros_like(v)
    span = float(size - 1)
    v = jnp.abs(v)
    extra = jnp.mod(v, span)
    flips = jnp.floor(v / span)
    odd = jnp.mod(flips, 2.0) != 0.0
    out = jnp.where(odd, span - extra, extra)
    return jnp.clip(out, 0.0, span)


def grid_sample_reflection(frame, grid):
    """F.grid_sample(frame, grid, align_corners=True, padding_mode='reflection')."""
    # TODO(synk): the data-dependent 4-neighbor gather stays in plain JAX;
    # Pallas TPU has no clean dynamic-gather primitive for this access pattern.
    B, C, H, W = frame.shape
    x = (grid[..., 0] + 1.0) * 0.5 * (W - 1)
    y = (grid[..., 1] + 1.0) * 0.5 * (H - 1)
    x = _reflect(x, W)
    y = _reflect(y, H)
    x0 = jnp.floor(x)
    y0 = jnp.floor(y)
    wx1 = x - x0
    wx0 = 1.0 - wx1
    wy1 = y - y0
    wy0 = 1.0 - wy1
    x0i = jnp.clip(x0, 0, W - 1).astype(jnp.int32)
    x1i = jnp.clip(x0 + 1, 0, W - 1).astype(jnp.int32)
    y0i = jnp.clip(y0, 0, H - 1).astype(jnp.int32)
    y1i = jnp.clip(y0 + 1, 0, H - 1).astype(jnp.int32)

    def per_batch(fr, x0i, x1i, y0i, y1i, wx0, wx1, wy0, wy1):
        flat = fr.reshape(C, H * W)

        def gather(yi, xi):
            idx = (yi * W + xi).reshape(-1)
            return flat[:, idx].reshape(C, *yi.shape)

        v00 = gather(y0i, x0i)
        v01 = gather(y0i, x1i)
        v10 = gather(y1i, x0i)
        v11 = gather(y1i, x1i)
        return (v00 * (wy0 * wx0)[None] + v01 * (wy0 * wx1)[None]
                + v10 * (wy1 * wx0)[None] + v11 * (wy1 * wx1)[None])

    return jax.vmap(per_batch)(frame, x0i, x1i, y0i, y1i, wx0, wx1, wy0, wy1)


class Transform:
    """JAX port of the FOMM random TPS transform; TPS warp runs in Pallas."""

    def __init__(self, bs, key, sigma_affine=0.05, sigma_tps=0.005, points_tps=5):
        k1, k2 = jax.random.split(key)
        noise = sigma_affine * jax.random.normal(k1, (bs, 2, 3), jnp.float32)
        self.theta = noise + jnp.eye(2, 3, dtype=jnp.float32)[None]
        self.bs = bs
        self.control_points = make_coordinate_grid_2d(points_tps, points_tps).reshape(-1, 2)
        self.control_params = sigma_tps * jax.random.normal(
            k2, (bs, points_tps ** 2), jnp.float32)

    def warp_coordinates(self, coordinates):
        return warp_coordinates_pallas(coordinates, self.theta,
                                       self.control_points, self.control_params)

    def transform_frame(self, frame):
        B, C, H, W = frame.shape
        grid = make_coordinate_grid_2d(H, W).reshape(1, H * W, 2)
        warped = self.warp_coordinates(grid).reshape(self.bs, H, W, 2)
        return grid_sample_reflection(frame, warped)


# ----------------------------------------------------------------------------
# Hopenet fc-head parameters: per-head Linear init, then fused/padded packing.
# ----------------------------------------------------------------------------
def init_head_params(key, n_bins=66, feat_dim=512 * 4):
    ks = jax.random.split(key, 6)
    bound = 1.0 / math.sqrt(feat_dim)

    def lin(kw, kb):
        w = jax.random.uniform(kw, (feat_dim, n_bins), jnp.float32, -bound, bound)
        b = jax.random.uniform(kb, (1, n_bins), jnp.float32, -bound, bound)
        return w, b

    w_yaw, b_yaw = lin(ks[0], ks[1])
    w_pitch, b_pitch = lin(ks[2], ks[3])
    w_roll, b_roll = lin(ks[4], ks[5])
    return {"w_yaw": w_yaw, "b_yaw": b_yaw,
            "w_pitch": w_pitch, "b_pitch": b_pitch,
            "w_roll": w_roll, "b_roll": b_roll}


def pack_head_params(params, n_bins=66, feat_dim=512 * 4):
    """Fuse yaw/pitch/roll into one (2048, 3*128) bf16 weight + (1, 3*128) f32 bias."""
    assert n_bins <= _HEAD_PAD
    w_cat = jnp.zeros((feat_dim, 3 * _HEAD_PAD), jnp.float32)
    b_cat = jnp.full((1, 3 * _HEAD_PAD), -1e30, jnp.float32)  # padded bins -> p=0
    for h, name in enumerate(("yaw", "pitch", "roll")):
        w_cat = w_cat.at[:, h * _HEAD_PAD:h * _HEAD_PAD + n_bins].set(params[f"w_{name}"])
        b_cat = b_cat.at[:, h * _HEAD_PAD:h * _HEAD_PAD + n_bins].set(params[f"b_{name}"][0])
    return {"w_cat": w_cat.astype(jnp.bfloat16), "b_cat": b_cat}


# ----------------------------------------------------------------------------
# trainer.py forward (the translatable parts).
# ----------------------------------------------------------------------------
def generator_full_forward(s, d, key, fused_head_params, n_bins=66):
    B = d.shape[0]
    k_t, k_feat, k_kp = jax.random.split(key, 3)

    transform = Transform(B, k_t)
    transformed_d = transform.transform_frame(d)
    cated = jnp.concatenate([s, d, transformed_d], axis=0)  # (3B, C, H, W)

    # TODO(synk): the frozen Hopenet ResNet-50 backbone (conv1..layer4 over the
    # 224x224-resized, imagenet-normalized `cated`) is not given; deterministic
    # stand-in layer4 features feed the fused Pallas head kernel instead.
    feat = 0.1 * jax.random.normal(k_feat, (cated.shape[0], 512 * 4, 7, 7), jnp.float32)
    real_yaw, real_pitch, real_roll = hopenet_head_pallas(feat, fused_head_params, n_bins)
    yaw_s, yaw_d, yaw_tran = jnp.split(real_yaw, 3, axis=0)
    pitch_s, pitch_d, pitch_tran = jnp.split(real_pitch, 3, axis=0)
    roll_s, roll_d, roll_tran = jnp.split(real_roll, 3, axis=0)

    # TODO(synk): efe/afe/ckd/hpe_ede/mfe/generator/discriminator (and the
    # DiscriminatorFull Discriminator/GANLoss), transform_kp and all loss
    # modules are undefined in the reference; their compute is omitted. The
    # equivariance reverse-warp path is exercised on stand-in canonical
    # keypoints via the same TPS warp (plain-JAX small-N path, N=15).
    num_kp = 15
    kp_c_tran = 0.2 * jax.random.normal(k_kp, (B, num_kp, 3), jnp.float32)
    reverse_kp_c = transform.warp_coordinates(kp_c_tran[:, :, :2])

    return {
        "transformed_d": transformed_d,
        "yaw_d": yaw_d, "pitch_d": pitch_d, "roll_d": roll_d,
        "yaw_s": yaw_s, "pitch_s": pitch_s, "roll_s": roll_s,
        "yaw_tran": yaw_tran, "pitch_tran": pitch_tran, "roll_tran": roll_tran,
        "reverse_kp_c": reverse_kp_c,
    }


if __name__ == "__main__":
    key = jax.random.PRNGKey(0)
    k_s, k_d, k_params, k_fwd, k_chk = jax.random.split(key, 5)

    B, C, H, W = 2, 3, 16, 16
    n_bins = 66
    s = jax.random.normal(k_s, (B, C, H, W), jnp.float32)
    d = jax.random.normal(k_d, (B, C, H, W), jnp.float32)
    head_params = pack_head_params(init_head_params(k_params, n_bins=n_bins),
                                   n_bins=n_bins)

    # --- correctness: Pallas TPS warp vs plain-JAX reference ----------------
    tr = Transform(B, jax.random.PRNGKey(1))
    grid2d = make_coordinate_grid_2d(H, W).reshape(1, H * W, 2)
    warp_ref = _warp_coordinates_ref(grid2d, tr.theta, tr.control_points,
                                     tr.control_params)
    warp_f32 = warp_coordinates_pallas(grid2d, tr.theta, tr.control_points,
                                       tr.control_params, use_bf16_rbf=False)
    assert bool(jnp.allclose(warp_f32, warp_ref, atol=1e-5, rtol=1e-5))
    if _bf16_transcendentals_ok():
        # bf16 EUP path (v6e/v7x): looser tolerance, bf16 rbf rounding ~1%.
        warp_b16 = warp_coordinates_pallas(grid2d, tr.theta, tr.control_points,
                                           tr.control_params, use_bf16_rbf=True)
        assert bool(jnp.allclose(warp_b16, warp_ref, atol=2e-2, rtol=0.0))

    # --- correctness: fused Pallas Hopenet head vs reference ----------------
    feat_chk = 0.1 * jax.random.normal(k_chk, (3 * B, 512 * 4, 7, 7), jnp.float32)
    head_pl = hopenet_head_pallas(feat_chk, head_params, n_bins)
    head_ref = _hopenet_head_ref(feat_chk, head_params, n_bins)
    assert all(bool(jnp.allclose(a, b, atol=5e-3))
               for a, b in zip(head_pl, head_ref))

    # --- full forward --------------------------------------------------------
    out = generator_full_forward(s, d, k_fwd, head_params, n_bins=n_bins)
    jax.block_until_ready(out)

    assert out["transformed_d"].shape == (B, C, H, W)
    assert out["yaw_d"].shape == (B,)
    assert out["reverse_kp_c"].shape == (B, 15, 2)
    assert all(bool(jnp.all(jnp.isfinite(v)))
               for v in jax.tree_util.tree_leaves(out))
    print("KERNEL_OK")
</pallas_src>

<mosaic_0001>
module attributes {stable_mosaic.version = 11 : i64} {
  func.func @_warp_kernel(%arg0: i32, %arg1: memref<12xf32, #tpu.memory_space<smem>>, %arg2: memref<50xf32, #tpu.memory_space<smem>>, %arg3: memref<50xf32, #tpu.memory_space<smem>>, %arg4: memref<2x2x128xf32, #tpu.memory_space<vmem>>, %arg5: memref<2x2x2x128xf32, #tpu.memory_space<vmem>>) attributes {dimension_semantics = [#tpu.dimension_semantics<parallel>], iteration_bounds = array<i64: 1>, scalar_prefetch = 0 : i64, scratch_operands = 0 : i64, tpu.core_type = #tpu.core_type<tc>, window_params = [{transform_indices = @transform_0, window_bounds = array<i64: 12>}, {transform_indices = @transform_1, window_bounds = array<i64: 50>}, {transform_indices = @transform_2, window_bounds = array<i64: 50>}, {transform_indices = @transform_3, window_bounds = array<i64: 2, 2, 128>}, {transform_indices = @transform_4, window_bounds = array<i64: 2, 2, 2, 128>}]} {
    %c0 = arith.constant 0 : index
    %c0_0 = arith.constant 0 : index
    %c0_1 = arith.constant 0 : index
    %0 = vector.load %arg4[%c0, %c0_0, %c0_1] : memref<2x2x128xf32, #tpu.memory_space<vmem>>, vector<1x2x128xf32>
    %1 = vector.shape_cast %0 : vector<1x2x128xf32> to vector<2x128xf32>
    %c1 = arith.constant 1 : index
    %c0_2 = arith.constant 0 : index
    %c0_3 = arith.constant 0 : index
    %2 = vector.load %arg4[%c1, %c0_2, %c0_3] : memref<2x2x128xf32, #tpu.memory_space<vmem>>, vector<1x2x128xf32>
    %3 = vector.shape_cast %2 : vector<1x2x128xf32> to vector<2x128xf32>
    %cst = arith.constant 0.000000e+00 : f32
    %4 = vector.broadcast %cst : f32 to vector<2x128xf32>
    %cst_4 = arith.constant 0.000000e+00 : f32
    %5 = vector.broadcast %cst_4 : f32 to vector<2x128xf32>
    %c0_5 = arith.constant 0 : index
    %6 = memref.load %arg2[%c0_5] : memref<50xf32, #tpu.memory_space<smem>>
    %c1_6 = arith.constant 1 : index
    %7 = memref.load %arg2[%c1_6] : memref<50xf32, #tpu.memory_space<smem>>
    %8 = vector.broadcast %6 : f32 to vector<2x128xf32>
    %9 = arith.subf %1, %8 : vector<2x128xf32>
    %10 = math.absf %9 : vector<2x128xf32>
    %11 = vector.broadcast %7 : f32 to vector<2x128xf32>
    %12 = arith.subf %3, %11 : vector<2x128xf32>
    %13 = math.absf %12 : vector<2x128xf32>
    %14 = arith.addf %10, %13 : vector<2x128xf32>
    %15 = arith.mulf %14, %14 : vector<2x128xf32>
    %cst_7 = arith.constant 9.99999997E-7 : f32
    %16 = vector.broadcast %cst_7 : f32 to vector<2x128xf32>
    %17 = arith.addf %14, %16 : vector<2x128xf32>
    %18 = math.log %17 : vector<2x128xf32>
    %19 = arith.mulf %15, %18 : vector<2x128xf32>
    %c0_8 = arith.constant 0 : index
    %20 = memref.load %arg3[%c0_8] : memref<50xf32, #tpu.memory_space<smem>>
    %21 = vector.broadcast %20 : f32 to vector<2x128xf32>
    %22 = arith.mulf %21, %19 : vector<2x128xf32>
    %23 = arith.addf %4, %22 : vector<2x128xf32>
    %c25 = arith.constant 25 : index
    %24 = memref.load %arg3[%c25] : memref<50xf32, #tpu.memory_space<smem>>
    %25 = vector.broadcast %24 : f32 to vector<2x128xf32>
    %26 = arith.mulf %25, %19 : vector<2x128xf32>
    %27 = arith.addf %5, %26 : vector<2x128xf32>
    %c2 = arith.constant 2 : index
    %28 = memref.load %arg2[%c2] : memref<50xf32, #tpu.memory_space<smem>>
    %c3 = arith.constant 3 : index
    %29 = memref.load %arg2[%c3] : memref<50xf32, #tpu.memory_space<smem>>
    %30 = vector.broadcast %28 : f32 to vector<2x128xf32>
    %31 = arith.subf %1, %30 : vector<2x128xf32>
    %32 = math.absf %31 : vector<2x128xf32>
    %33 = vector.broadcast %29 : f32 to vector<2x128xf32>
    %34 = arith.subf %3, %33 : vector<2x128xf32>
    %35 = math.absf %34 : vector<2x128xf32>
    %36 = arith.addf %32, %35 : vector<2x128xf32>
    %37 = arith.mulf %36, %36 : vector<2x128xf32>
    %cst_9 = arith.constant 9.99999997E-7 : f32
    %38 = vector.broadcast %cst_9 : f32 to vector<2x128xf32>
    %39 = arith.addf %36, %38 : vector<2x128xf32>
    %40 = math.log %39 : vector<2x128xf32>
    %41 = arith.mulf %37, %40 : vector<2x128xf32>
    %c1_10 = arith.constant 1 : index
    %42 = memref.load %arg3[%c1_10] : memref<50xf32, #tpu.memory_space<smem>>
    %43 = vector.broadcast %42 : f32 to vector<2x128xf32>
    %44 = arith.mulf %43, %41 : vector<2x128xf32>
    %45 = arith.addf %23, %44 : vector<2x128xf32>
    %c26 = arith.constant 26 : index
    %46 = memref.load %arg3[%c26] : memref<50xf32, #tpu.memory_space<smem>>
    %47 = vector.broadcast %46 : f32 to vector<2x128xf32>
    %48 = arith.mulf %47, %41 : vector<2x128xf32>
    %49 = arith.addf %27, %48 : vector<2x128xf32>
    %c4 = arith.constant 4 : index
    %50 = memref.load %arg2[%c4] : memref<50xf32, #tpu.memory_space<smem>>
    %c5 = arith.constant 5 : index
    %51 = memref.load %arg2[%c5] : memref<50xf32, #tpu.memory_space<smem>>
    %52 = vector.broadcast %50 : f32 to vector<2x128xf32>
    %53 = arith.subf %1, %52 : vector<2x128xf32>
    %54 = math.absf %53 : vector<2x128xf32>
    %55 = vector.broadcast %51 : f32 to vector<2x128xf32>
    %56 = arith.subf %3, %55 : vector<2x128xf32>
    %57 = math.absf %56 : vector<2x128xf32>
    %58 = arith.addf %54, %57 : vector<2x128xf32>
    %59 = arith.mulf %58, %58 : vector<2x128xf32>
    %cst_11 = arith.constant 9.99999997E-7 : f32
    %60 = vector.broadcast %cst_11 : f32 to vector<2x128xf32>
    %61 = arith.addf %58, %60 : vector<2x128xf32>
    %62 = math.log %61 : vector<2x128xf32>
    %63 = arith.mulf %59, %62 : vector<2x128xf32>
    %c2_12 = arith.constant 2 : index
    %64 = memref.load %arg3[%c2_12] : memref<50xf32, #tpu.memory_space<smem>>
    %65 = vector.broadcast %64 : f32 to vector<2x128xf32>
    %66 = arith.mulf %65, %63 : vector<2x128xf32>
    %67 = arith.addf %45, %66 : vector<2x128xf32>
    %c27 = arith.constant 27 : index
    %68 = memref.load %arg3[%c27] : memref<50xf32, #tpu.memory_space<smem>>
    %69 = vector.broadcast %68 : f32 to vector<2x128xf32>
    %70 = arith.mulf %69, %63 : vector<2x128xf32>
    %71 = arith.addf %49, %70 : vector<2x128xf32>
    %c6 = arith.constant 6 : index
    %72 = memref.load %arg2[%c6] : memref<50xf32, #tpu.memory_space<smem>>
    %c7 = arith.constant 7 : index
    %73 = memref.load %arg2[%c7] : memref<50xf32, #tpu.memory_space<smem>>
    %74 = vector.broadcast %72 : f32 to vector<2x128xf32>
    %75 = arith.subf %1, %74 : vector<2x128xf32>
    %76 = math.absf %75 : vector<2x128xf32>
    %77 = vector.broadcast %73 : f32 to vector<2x128xf32>
    %78 = arith.subf %3, %77 : vector<2x128xf32>
    %79 = math.absf %78 : vector<2x128xf32>
    %80 = arith.addf %76, %79 : vector<2x128xf32>
    %81 = arith.mulf %80, %80 : vector<2x128xf32>
    %cst_13 = arith.constant 9.99999997E-7 : f32
    %82 = vector.broadcast %cst_13 : f32 to vector<2x128xf32>
    %83 = arith.addf %80, %82 : vector<2x128xf32>
    %84 = math.log %83 : vector<2x128xf32>
    %85 = arith.mulf %81, %84 : vector<2x128xf32>
    %c3_14 = arith.constant 3 : index
    %86 = memref.load %arg3[%c3_14] : memref<50xf32, #tpu.memory_space<smem>>
    %87 = vector.broadcast %86 : f32 to vector<2x128xf32>
    %88 = arith.mulf %87, %85 : vector<2x128xf32>
    %89 = arith.addf %67, %88 : vector<2x128xf32>
    %c28 = arith.constant 28 : index
    %90 = memref.load %arg3[%c28] : memref<50xf32, #tpu.memory_space<smem>>
    %91 = vector.broadcast %90 : f32 to vector<2x128xf32>
    %92 = arith.mulf %91, %85 : vector<2x128xf32>
    %93 = arith.addf %71, %92 : vector<2x128xf32>
    %c8 = arith.constant 8 : index
    %94 = memref.load %arg2[%c8] : memref<50xf32, #tpu.memory_space<smem>>
    %c9 = arith.constant 9 : index
    %95 = memref.load %arg2[%c9] : memref<50xf32, #tpu.memory_space<smem>>
    %96 = vector.broadcast %94 : f32 to vector<2x128xf32>
    %97 = arith.subf %1, %96 : vector<2x128xf32>
    %98 = math.absf %97 : vector<2x128xf32>
    %99 = vector.broadcast %95 : f32 to vector<2x128xf32>
    %100 = arith.subf %3, %99 : vector<2x128xf32>
    %101 = math.absf %100 : vector<2x128xf32>
    %102 = arith.addf %98, %101 : vector<2x128xf32>
    %103 = arith.mulf %102, %102 : vector<2x128xf32>
    %cst_15 = arith.constant 9.99999997E-7 : f32
    %104 = vector.broadcast %cst_15 : f32 to vector<2x128xf32>
    %105 = arith.addf %102, %104 : vector<2x128xf32>
    %106 = math.log %105 : vector<2x128xf32>
    %107 = arith.mulf %103, %106 : vector<2x128xf32>
    %c4_16 = arith.constant 4 : index
    %108 = memref.load %arg3[%c4_16] : memref<50xf32, #tpu.memory_space<smem>>
    %109 = vector.broadcast %108 : f32 to vector<2x128xf32>
    %110 = arith.mulf %109, %107 : vector<2x128xf32>
    %111 = arith.addf %89, %110 : vector<2x128xf32>
    %c29 = arith.constant 29 : index
    %112 = memref.load %arg3[%c29] : memref<50xf32, #tpu.memory_space<smem>>
    %113 = vector.broadcast %112 : f32 to vector<2x128xf32>
    %114 = arith.mulf %113, %107 : vector<2x128xf32>
    %115 = arith.addf %93, %114 : vector<2x128xf32>
    %c10 = arith.constant 10 : index
    %116 = memref.load %arg2[%c10] : memref<50xf32, #tpu.memory_space<smem>>
    %c11 = arith.constant 11 : index
    %117 = memref.load %arg2[%c11] : memref<50xf32, #tpu.memory_space<smem>>
    %118 = vector.broadcast %116 : f32 to vector<2x128xf32>
    %119 = arith.subf %1, %118 : vector<2x128xf32>
    %120 = math.absf %119 : vector<2x128xf32>
    %121 = vector.broadcast %117 : f32 to vector<2x128xf32>
    %122 = arith.subf %3, %121 : vector<2x128xf32>
    %123 = math.absf %122 : vector<2x128xf32>
    %124 = arith.addf %120, %123 : vector<2x128xf32>
    %125 = arith.mulf %124, %124 : vector<2x128xf32>
    %cst_17 = arith.constant 9.99999997E-7 : f32
    %126 = vector.broadcast %cst_17 : f32 to vector<2x128xf32>
    %127 = arith.addf %124, %126 : vector<2x128xf32>
    %128 = math.log %127 : vector<2x128xf32>
    %129 = arith.mulf %125, %128 : vector<2x128xf32>
    %c5_18 = arith.constant 5 : index
    %130 = memref.load %arg3[%c5_18] : memref<50xf32, #tpu.memory_space<smem>>
    %131 = vector.broadcast %130 : f32 to vector<2x128xf32>
    %132 = arith.mulf %131, %129 : vector<2x128xf32>
    %133 = arith.addf %111, %132 : vector<2x128xf32>
    %c30 = arith.constant 30 : index
    %134 = memref.load %arg3[%c30] : memref<50xf32, #tpu.memory_space<smem>>
    %135 = vector.broadcast %134 : f32 to vector<2x128xf32>
    %136 = arith.mulf %135, %129 : vector<2x128xf32>
    %137 = arith.addf %115, %136 : vector<2x128xf32>
    %c12 = arith.constant 12 : index
    %138 = memref.load %arg2[%c12] : memref<50xf32, #tpu.memory_space<smem>>
    %c13 = arith.constant 13 : index
    %139 = memref.load %arg2[%c13] : memref<50xf32, #tpu.memory_space<smem>>
    %140 = vector.broadcast %138 : f32 to vector<2x128xf32>
    %141 = arith.subf %1, %140 : vector<2x128xf32>
    %142 = math.absf %141 : vector<2x128xf32>
    %143 = vector.broadcast %139 : f32 to vector<2x128xf32>
    %144 = arith.subf %3, %143 : vector<2x128xf32>
    %145 = math.absf %144 : vector<2x128xf32>
    %146 = arith.addf %142, %145 : vector<2x128xf32>
    %147 = arith.mulf %146, %146 : vector<2x128xf32>
    %cst_19 = arith.constant 9.99999997E-7 : f32
    %148 = vector.broadcast %cst_19 : f32 to vector<2x128xf32>
    %149 = arith.addf %146, %148 : vector<2x128xf32>
    %150 = math.log %149 : vector<2x128xf32>
    %151 = arith.mulf %147, %150 : vector<2x128xf32>
    %c6_20 = arith.constant 6 : index
    %152 = memref.load %arg3[%c6_20] : memref<50xf32, #tpu.memory_space<smem>>
    %153 = vector.broadcast %152 : f32 to vector<2x128xf32>
    %154 = arith.mulf %153, %151 : vector<2x128xf32>
    %155 = arith.addf %133, %154 : vector<2x128xf32>
    %c31 = arith.constant 31 : index
    %156 = memref.load %arg3[%c31] : memref<50xf32, #tpu.memory_space<smem>>
    %157 = vector.broadcast %156 : f32 to vector<2x128xf32>
    %158 = arith.mulf %157, %151 : vector<2x128xf32>
    %159 = arith.addf %137, %158 : vector<2x128xf32>
    %c14 = arith.constant 14 : index
    %160 = memref.load %arg2[%c14] : memref<50xf32, #tpu.memory_space<smem>>
    %c15 = arith.constant 15 : index
    %161 = memref.load %arg2[%c15] : memref<50xf32, #tpu.memory_space<smem>>
    %162 = vector.broadcast %160 : f32 to vector<2x128xf32>
    %163 = arith.subf %1, %162 : vector<2x128xf32>
    %164 = math.absf %163 : vector<2x128xf32>
    %165 = vector.broadcast %161 : f32 to vector<2x128xf32>
    %166 = arith.subf %3, %165 : vector<2x128xf32>
    %167 = math.absf %166 : vector<2x128xf32>
    %168 = arith.addf %164, %167 : vector<2x128xf32>
    %169 = arith.mulf %168, %168 : vector<2x128xf32>
    %cst_21 = arith.constant 9.99999997E-7 : f32
    %170 = vector.broadcast %cst_21 : f32 to vector<2x128xf32>
    %171 = arith.addf %168, %170 : vector<2x128xf32>
    %172 = math.log %171 : vector<2x128xf32>
    %173 = arith.mulf %169, %172 : vector<2x128xf32>
    %c7_22 = arith.constant 7 : index
    %174 = memref.load %arg3[%c7_22] : memref<50xf32, #tpu.memory_space<smem>>
    %175 = vector.broadcast %174 : f32 to vector<2x128xf32>
    %176 = arith.mulf %175, %173 : vector<2x128xf32>
    %177 = arith.addf %155, %176 : vector<2x128xf32>
    %c32 = arith.constant 32 : index
    %178 = memref.load %arg3[%c32] : memref<50xf32, #tpu.memory_space<smem>>
    %179 = vector.broadcast %178 : f32 to vector<2x128xf32>
    %180 = arith.mulf %179, %173 : vector<2x128xf32>
    %181 = arith.addf %159, %180 : vector<2x128xf32>
    %c16 = arith.constant 16 : index
    %182 = memref.load %arg2[%c16] : memref<50xf32, #tpu.memory_space<smem>>
    %c17 = arith.constant 17 : index
    %183 = memref.load %arg2[%c17] : memref<50xf32, #tpu.memory_space<smem>>
    %184 = vector.broadcast %182 : f32 to vector<2x128xf32>
    %185 = arith.subf %1, %184 : vector<2x128xf32>
    %186 = math.absf %185 : vector<2x128xf32>
    %187 = vector.broadcast %183 : f32 to vector<2x128xf32>
    %188 = arith.subf %3, %187 : vector<2x128xf32>
    %189 = math.absf %188 : vector<2x128xf32>
    %190 = arith.addf %186, %189 : vector<2x128xf32>
    %191 = arith.mulf %190, %190 : vector<2x128xf32>
    %cst_23 = arith.constant 9.99999997E-7 : f32
    %192 = vector.broadcast %cst_23 : f32 to vector<2x128xf32>
    %193 = arith.addf %190, %192 : vector<2x128xf32>
    %194 = math.log %193 : vector<2x128xf32>
    %195 = arith.mulf %191, %194 : vector<2x128xf32>
    %c8_24 = arith.constant 8 : index
    %196 = memref.load %arg3[%c8_24] : memref<50xf32, #tpu.memory_space<smem>>
    %197 = vector.broadcast %196 : f32 to vector<2x128xf32>
    %198 = arith.mulf %197, %195 : vector<2x128xf32>
    %199 = arith.addf %177, %198 : vector<2x128xf32>
    %c33 = arith.constant 33 : index
    %200 = memref.load %arg3[%c33] : memref<50xf32, #tpu.memory_space<smem>>
    %201 = vector.broadcast %200 : f32 to vector<2x128xf32>
    %202 = arith.mulf %201, %195 : vector<2x128xf32>
    %203 = arith.addf %181, %202 : vector<2x128xf32>
    %c18 = arith.constant 18 : index
    %204 = memref.load %arg2[%c18] : memref<50xf32, #tpu.memory_space<smem>>
    %c19 = arith.constant 19 : index
    %205 = memref.load %arg2[%c19] : memref<50xf32, #tpu.memory_space<smem>>
    %206 = vector.broadcast %204 : f32 to vector<2x128xf32>
    %207 = arith.subf %1, %206 : vector<2x128xf32>
    %208 = math.absf %207 : vector<2x128xf32>
    %209 = vector.broadcast %205 : f32 to vector<2x128xf32>
    %210 = arith.subf %3, %209 : vector<2x128xf32>
    %211 = math.absf %210 : vector<2x128xf32>
    %212 = arith.addf %208, %211 : vector<2x128xf32>
    %213 = arith.mulf %212, %212 : vector<2x128xf32>
    %cst_25 = arith.constant 9.99999997E-7 : f32
    %214 = vector.broadcast %cst_25 : f32 to vector<2x128xf32>
    %215 = arith.addf %212, %214 : vector<2x128xf32>
    %216 = math.log %215 : vector<2x128xf32>
    %217 = arith.mulf %213, %216 : vector<2x128xf32>
    %c9_26 = arith.constant 9 : index
    %218 = memref.load %arg3[%c9_26] : memref<50xf32, #tpu.memory_space<smem>>
    %219 = vector.broadcast %218 : f32 to vector<2x128xf32>
    %220 = arith.mulf %219, %217 : vector<2x128xf32>
    %221 = arith.addf %199, %220 : vector<2x128xf32>
    %c34 = arith.constant 34 : index
    %222 = memref.load %arg3[%c34] : memref<50xf32, #tpu.memory_space<smem>>
    %223 = vector.broadcast %222 : f32 to vector<2x128xf32>
    %224 = arith.mulf %223, %217 : vector<2x128xf32>
    %225 = arith.addf %203, %224 : vector<2x128xf32>
    %c20 = arith.constant 20 : index
    %226 = memref.load %arg2[%c20] : memref<50xf32, #tpu.memory_space<smem>>
    %c21 = arith.constant 21 : index
    %227 = memref.load %arg2[%c21] : memref<50xf32, #tpu.memory_space<smem>>
    %228 = vector.broadcast %226 : f32 to vector<2x128xf32>
    %229 = arith.subf %1, %228 : vector<2x128xf32>
    %230 = math.absf %229 : vector<2x128xf32>
    %231 = vector.broadcast %227 : f32 to vector<2x128xf32>
    %232 = arith.subf %3, %231 : vector<2x128xf32>
    %233 = math.absf %232 : vector<2x128xf32>
    %234 = arith.addf %230, %233 : vector<2x128xf32>
    %235 = arith.mulf %234, %234 : vector<2x128xf32>
    %cst_27 = arith.constant 9.99999997E-7 : f32
    %236 = vector.broadcast %cst_27 : f32 to vector<2x128xf32>
    %237 = arith.addf %234, %236 : vector<2x128xf32>
    %238 = math.log %237 : vector<2x128xf32>
    %239 = arith.mulf %235, %238 : vector<2x128xf32>
    %c10_28 = arith.constant 10 : index
    %240 = memref.load %arg3[%c10_28] : memref<50xf32, #tpu.memory_space<smem>>
    %241 = vector.broadcast %240 : f32 to vector<2x128xf32>
    %242 = arith.mulf %241, %239 : vector<2x128xf32>
    %243 = arith.addf %221, %242 : vector<2x128xf32>
    %c35 = arith.constant 35 : index
    %244 = memref.load %arg3[%c35] : memref<50xf32, #tpu.memory_space<smem>>
    %245 = vector.broadcast %244 : f32 to vector<2x128xf32>
    %246 = arith.mulf %245, %239 : vector<2x128xf32>
    %247 = arith.addf %225, %246 : vector<2x128xf32>
    %c22 = arith.constant 22 : index
    %248 = memref.load %arg2[%c22] : memref<50xf32, #tpu.memory_space<smem>>
    %c23 = arith.constant 23 : index
    %249 = memref.load %arg2[%c23] : memref<50xf32, #tpu.memory_space<smem>>
    %250 = vector.broadcast %248 : f32 to vector<2x128xf32>
    %251 = arith.subf %1, %250 : vector<2x128xf32>
    %252 = math.absf %251 : vector<2x128xf32>
    %253 = vector.broadcast %249 : f32 to vector<2x128xf32>
    %254 = arith.subf %3, %253 : vector<2x128xf32>
    %255 = math.absf %254 : vector<2x128xf32>
    %256 = arith.addf %252, %255 : vector<2x128xf32>
    %257 = arith.mulf %256, %256 : vector<2x128xf32>
    %cst_29 = arith.constant 9.99999997E-7 : f32
    %258 = vector.broadcast %cst_29 : f32 to vector<2x128xf32>
    %259 = arith.addf %256, %258 : vector<2x128xf32>
    %260 = math.log %259 : vector<2x128xf32>
    %261 = arith.mulf %257, %260 : vector<2x128xf32>
    %c11_30 = arith.constant 11 : index
    %262 = memref.load %arg3[%c11_30] : memref<50xf32, #tpu.memory_space<smem>>
    %263 = vector.broadcast %262 : f32 to vector<2x128xf32>
    %264 = arith.mulf %263, %261 : vector<2x128xf32>
    %265 = arith.addf %243, %264 : vector<2x128xf32>
    %c36 = arith.constant 36 : index
    %266 = memref.load %arg3[%c36] : memref<50xf32, #tpu.memory_space<smem>>
    %267 = vector.broadcast %266 : f32 to vector<2x128xf32>
    %268 = arith.mulf %267, %261 : vector<2x128xf32>
    %269 = arith.addf %247, %268 : vector<2x128xf32>
    %c24 = arith.constant 24 : index
    %270 = memref.load %arg2[%c24] : memref<50xf32, #tpu.memory_space<smem>>
    %c25_31 = arith.constant 25 : index
    %271 = memref.load %arg2[%c25_31] : memref<50xf32, #tpu.memory_space<smem>>
    %272 = vector.broadcast %270 : f32 to vector<2x128xf32>
    %273 = arith.subf %1, %272 : vector<2x128xf32>
    %274 = math.absf %273 : vector<2x128xf32>
    %275 = vector.broadcast %271 : f32 to vector<2x128xf32>
    %276 = arith.subf %3, %275 : vector<2x128xf32>
    %277 = math.absf %276 : vector<2x128xf32>
    %278 = arith.addf %274, %277 : vector<2x128xf32>
    %279 = arith.mulf %278, %278 : vector<2x128xf32>
    %cst_32 = arith.constant 9.99999997E-7 : f32
    %280 = vector.broadcast %cst_32 : f32 to vector<2x128xf32>
    %281 = arith.addf %278, %280 : vector<2x128xf32>
    %282 = math.log %281 : vector<2x128xf32>
    %283 = arith.mulf %279, %282 : vector<2x128xf32>
    %c12_33 = arith.constant 12 : index
    %284 = memref.load %arg3[%c12_33] : memref<50xf32, #tpu.memory_space<smem>>
    %285 = vector.broadcast %284 : f32 to vector<2x128xf32>
    %286 = arith.mulf %285, %283 : vector<2x128xf32>
    %287 = arith.addf %265, %286 : vector<2x128xf32>
    %c37 = arith.constant 37 : index
    %288 = memref.load %arg3[%c37] : memref<50xf32, #tpu.memory_space<smem>>
    %289 = vector.broadcast %288 : f32 to vector<2x128xf32>
    %290 = arith.mulf %289, %283 : vector<2x128xf32>
    %291 = arith.addf %269, %290 : vector<2x128xf32>
    %c26_34 = arith.constant 26 : index
    %292 = memref.load %arg2[%c26_34] : memref<50xf32, #tpu.memory_space<smem>>
    %c27_35 = arith.constant 27 : index
    %293 = memref.load %arg2[%c27_35] : memref<50xf32, #tpu.memory_space<smem>>
    %294 = vector.broadcast %292 : f32 to vector<2x128xf32>
    %295 = arith.subf %1, %294 : vector<2x128xf32>
    %296 = math.absf %295 : vector<2x128xf32>
    %297 = vector.broadcast %293 : f32 to vector<2x128xf32>
    %298 = arith.subf %3, %297 : vector<2x128xf32>
    %299 = math.absf %298 : vector<2x128xf32>
    %300 = arith.addf %296, %299 : vector<2x128xf32>
    %301 = arith.mulf %300, %300 : vector<2x128xf32>
    %cst_36 = arith.constant 9.99999997E-7 : f32
    %302 = vector.broadcast %cst_36 : f32 to vector<2x128xf32>
    %303 = arith.addf %300, %302 : vector<2x128xf32>
    %304 = math.log %303 : vector<2x128xf32>
    %305 = arith.mulf %301, %304 : vector<2x128xf32>
    %c13_37 = arith.constant 13 : index
    %306 = memref.load %arg3[%c13_37] : memref<50xf32, #tpu.memory_space<smem>>
    %307 = vector.broadcast %306 : f32 to vector<2x128xf32>
    %308 = arith.mulf %307, %305 : vector<2x128xf32>
    %309 = arith.addf %287, %308 : vector<2x128xf32>
    %c38 = arith.constant 38 : index
    %310 = memref.load %arg3[%c38] : memref<50xf32, #tpu.memory_space<smem>>
    %311 = vector.broadcast %310 : f32 to vector<2x128xf32>
    %312 = arith.mulf %311, %305 : vector<2x128xf32>
    %313 = arith.addf %291, %312 : vector<2x128xf32>
    %c28_38 = arith.constant 28 : index
    %314 = memref.load %arg2[%c28_38] : memref<50xf32, #tpu.memory_space<smem>>
    %c29_39 = arith.constant 29 : index
    %315 = memref.load %arg2[%c29_39] : memref<50xf32, #tpu.memory_space<smem>>
    %316 = vector.broadcast %314 : f32 to vector<2x128xf32>
    %317 = arith.subf %1, %316 : vector<2x128xf32>
    %318 = math.absf %317 : vector<2x128xf32>
    %319 = vector.broadcast %315 : f32 to vector<2x128xf32>
    %320 = arith.subf %3, %319 : vector<2x128xf32>
    %321 = math.absf %320 : vector<2x128xf32>
    %322 = arith.addf %318, %321 : vector<2x128xf32>
    %323 = arith.mulf %322, %322 : vector<2x128xf32>
    %cst_40 = arith.constant 9.99999997E-7 : f32
    %324 = vector.broadcast %cst_40 : f32 to vector<2x128xf32>
    %325 = arith.addf %322, %324 : vector<2x128xf32>
    %326 = math.log %325 : vector<2x128xf32>
    %327 = arith.mulf %323, %326 : vector<2x128xf32>
    %c14_41 = arith.constant 14 : index
    %328 = memref.load %arg3[%c14_41] : memref<50xf32, #tpu.memory_space<smem>>
    %329 = vector.broadcast %328 : f32 to vector<2x128xf32>
    %330 = arith.mulf %329, %327 : vector<2x128xf32>
    %331 = arith.addf %309, %330 : vector<2x128xf32>
    %c39 = arith.constant 39 : index
    %332 = memref.load %arg3[%c39] : memref<50xf32, #tpu.memory_space<smem>>
    %333 = vector.broadcast %332 : f32 to vector<2x128xf32>
    %334 = arith.mulf %333, %327 : vector<2x128xf32>
    %335 = arith.addf %313, %334 : vector<2x128xf32>
    %c30_42 = arith.constant 30 : index
    %336 = memref.load %arg2[%c30_42] : memref<50xf32, #tpu.memory_space<smem>>
    %c31_43 = arith.constant 31 : index
    %337 = memref.load %arg2[%c31_43] : memref<50xf32, #tpu.memory_space<smem>>
    %338 = vector.broadcast %336 : f32 to vector<2x128xf32>
    %339 = arith.subf %1, %338 : vector<2x128xf32>
    %340 = math.absf %339 : vector<2x128xf32>
    %341 = vector.broadcast %337 : f32 to vector<2x128xf32>
    %342 = arith.subf %3, %341 : vector<2x128xf32>
    %343 = math.absf %342 : vector<2x128xf32>
    %344 = arith.addf %340, %343 : vector<2x128xf32>
    %345 = arith.mulf %344, %344 : vector<2x128xf32>
    %cst_44 = arith.constant 9.99999997E-7 : f32
    %346 = vector.broadcast %cst_44 : f32 to vector<2x128xf32>
    %347 = arith.addf %344, %346 : vector<2x128xf32>
    %348 = math.log %347 : vector<2x128xf32>
    %349 = arith.mulf %345, %348 : vector<2x128xf32>
    %c15_45 = arith.constant 15 : index
    %350 = memref.load %arg3[%c15_45] : memref<50xf32, #tpu.memory_space<smem>>
    %351 = vector.broadcast %350 : f32 to vector<2x128xf32>
    %352 = arith.mulf %351, %349 : vector<2x128xf32>
    %353 = arith.addf %331, %352 : vector<2x128xf32>
    %c40 = arith.constant 40 : index
    %354 = memref.load %arg3[%c40] : memref<50xf32, #tpu.memory_space<smem>>
    %355 = vector.broadcast %354 : f32 to vector<2x128xf32>
    %356 = arith.mulf %355, %349 : vector<2x128xf32>
    %357 = arith.addf %335, %356 : vector<2x128xf32>
    %c32_46 = arith.constant 32 : index
    %358 = memref.load %arg2[%c32_46] : memref<50xf32, #tpu.memory_space<smem>>
    %c33_47 = arith.constant 33 : index
    %359 = memref.load %arg2[%c33_47] : memref<50xf32, #tpu.memory_space<smem>>
    %360 = vector.broadcast %358 : f32 to vector<2x128xf32>
    %361 = arith.subf %1, %360 : vector<2x128xf32>
    %362 = math.absf %361 : vector<2x128xf32>
    %363 = vector.broadcast %359 : f32 to vector<2x128xf32>
    %364 = arith.subf %3, %363 : vector<2x128xf32>
    %365 = math.absf %364 : vector<2x128xf32>
    %366 = arith.addf %362, %365 : vector<2x128xf32>
    %367 = arith.mulf %366, %366 : vector<2x128xf32>
    %cst_48 = arith.constant 9.99999997E-7 : f32
    %368 = vector.broadcast %cst_48 : f32 to vector<2x128xf32>
    %369 = arith.addf %366, %368 : vector<2x128xf32>
    %370 = math.log %369 : vector<2x128xf32>
    %371 = arith.mulf %367, %370 : vector<2x128xf32>
    %c16_49 = arith.constant 16 : index
    %372 = memref.load %arg3[%c16_49] : memref<50xf32, #tpu.memory_space<smem>>
    %373 = vector.broadcast %372 : f32 to vector<2x128xf32>
    %374 = arith.mulf %373, %371 : vector<2x128xf32>
    %375 = arith.addf %353, %374 : vector<2x128xf32>
    %c41 = arith.constant 41 : index
    %376 = memref.load %arg3[%c41] : memref<50xf32, #tpu.memory_space<smem>>
    %377 = vector.broadcast %376 : f32 to vector<2x128xf32>
    %378 = arith.mulf %377, %371 : vector<2x128xf32>
    %379 = arith.addf %357, %378 : vector<2x128xf32>
    %c34_50 = arith.constant 34 : index
    %380 = memref.load %arg2[%c34_50] : memref<50xf32, #tpu.memory_space<smem>>
    %c35_51 = arith.constant 35 : index
    %381 = memref.load %arg2[%c35_51] : memref<50xf32, #tpu.memory_space<smem>>
    %382 = vector.broadcast %380 : f32 to vector<2x128xf32>
    %383 = arith.subf %1, %382 : vector<2x128xf32>
    %384 = math.absf %383 : vector<2x128xf32>
    %385 = vector.broadcast %381 : f32 to vector<2x128xf32>
    %386 = arith.subf %3, %385 : vector<2x128xf32>
    %387 = math.absf %386 : vector<2x128xf32>
    %388 = arith.addf %384, %387 : vector<2x128xf32>
    %389 = arith.mulf %388, %388 : vector<2x128xf32>
    %cst_52 = arith.constant 9.99999997E-7 : f32
    %390 = vector.broadcast %cst_52 : f32 to vector<2x128xf32>
    %391 = arith.addf %388, %390 : vector<2x128xf32>
    %392 = math.log %391 : vector<2x128xf32>
    %393 = arith.mulf %389, %392 : vector<2x128xf32>
    %c17_53 = arith.constant 17 : index
    %394 = memref.load %arg3[%c17_53] : memref<50xf32, #tpu.memory_space<smem>>
    %395 = vector.broadcast %394 : f32 to vector<2x128xf32>
    %396 = arith.mulf %395, %393 : vector<2x128xf32>
    %397 = arith.addf %375, %396 : vector<2x128xf32>
    %c42 = arith.constant 42 : index
    %398 = memref.load %arg3[%c42] : memref<50xf32, #tpu.memory_space<smem>>
    %399 = vector.broadcast %398 : f32 to vector<2x128xf32>
    %400 = arith.mulf %399, %393 : vector<2x128xf32>
    %401 = arith.addf %379, %400 : vector<2x128xf32>
    %c36_54 = arith.constant 36 : index
    %402 = memref.load %arg2[%c36_54] : memref<50xf32, #tpu.memory_space<smem>>
    %c37_55 = arith.constant 37 : index
    %403 = memref.load %arg2[%c37_55] : memref<50xf32, #tpu.memory_space<smem>>
    %404 = vector.broadcast %402 : f32 to vector<2x128xf32>
    %405 = arith.subf %1, %404 : vector<2x128xf32>
    %406 = math.absf %405 : vector<2x128xf32>
    %407 = vector.broadcast %403 : f32 to vector<2x128xf32>
    %408 = arith.subf %3, %407 : vector<2x128xf32>
    %409 = math.absf %408 : vector<2x128xf32>
    %410 = arith.addf %406, %409 : vector<2x128xf32>
    %411 = arith.mulf %410, %410 : vector<2x128xf32>
    %cst_56 = arith.constant 9.99999997E-7 : f32
    %412 = vector.broadcast %cst_56 : f32 to vector<2x128xf32>
    %413 = arith.addf %410, %412 : vector<2x128xf32>
    %414 = math.log %413 : vector<2x128xf32>
    %415 = arith.mulf %411, %414 : vector<2x128xf32>
    %c18_57 = arith.constant 18 : index
    %416 = memref.load %arg3[%c18_57] : memref<50xf32, #tpu.memory_space<smem>>
    %417 = vector.broadcast %416 : f32 to vector<2x128xf32>
    %418 = arith.mulf %417, %415 : vector<2x128xf32>
    %419 = arith.addf %397, %418 : vector<2x128xf32>
    %c43 = arith.constant 43 : index
    %420 = memref.load %arg3[%c43] : memref<50xf32, #tpu.memory_space<smem>>
    %421 = vector.broadcast %420 : f32 to vector<2x128xf32>
    %422 = arith.mulf %421, %415 : vector<2x128xf32>
    %423 = arith.addf %401, %422 : vector<2x128xf32>
    %c38_58 = arith.constant 38 : index
    %424 = memref.load %arg2[%c38_58] : memref<50xf32, #tpu.memory_space<smem>>
    %c39_59 = arith.constant 39 : index
    %425 = memref.load %arg2[%c39_59] : memref<50xf32, #tpu.memory_space<smem>>
    %426 = vector.broadcast %424 : f32 to vector<2x128xf32>
    %427 = arith.subf %1, %426 : vector<2x128xf32>
    %428 = math.absf %427 : vector<2x128xf32>
    %429 = vector.broadcast %425 : f32 to vector<2x128xf32>
    %430 = arith.subf %3, %429 : vector<2x128xf32>
    %431 = math.absf %430 : vector<2x128xf32>
    %432 = arith.addf %428, %431 : vector<2x128xf32>
    %433 = arith.mulf %432, %432 : vector<2x128xf32>
    %cst_60 = arith.constant 9.99999997E-7 : f32
    %434 = vector.broadcast %cst_60 : f32 to vector<2x128xf32>
    %435 = arith.addf %432, %434 : vector<2x128xf32>
    %436 = math.log %435 : vector<2x128xf32>
    %437 = arith.mulf %433, %436 : vector<2x128xf32>
    %c19_61 = arith.constant 19 : index
    %438 = memref.load %arg3[%c19_61] : memref<50xf32, #tpu.memory_space<smem>>
    %439 = vector.broadcast %438 : f32 to vector<2x128xf32>
    %440 = arith.mulf %439, %437 : vector<2x128xf32>
    %441 = arith.addf %419, %440 : vector<2x128xf32>
    %c44 = arith.constant 44 : index
    %442 = memref.load %arg3[%c44] : memref<50xf32, #tpu.memory_space<smem>>
    %443 = vector.broadcast %442 : f32 to vector<2x128xf32>
    %444 = arith.mulf %443, %437 : vector<2x128xf32>
    %445 = arith.addf %423, %444 : vector<2x128xf32>
    %c40_62 = arith.constant 40 : index
    %446 = memref.load %arg2[%c40_62] : memref<50xf32, #tpu.memory_space<smem>>
    %c41_63 = arith.constant 41 : index
    %447 = memref.load %arg2[%c41_63] : memref<50xf32, #tpu.memory_space<smem>>
    %448 = vector.broadcast %446 : f32 to vector<2x128xf32>
    %449 = arith.subf %1, %448 : vector<2x128xf32>
    %450 = math.absf %449 : vector<2x128xf32>
    %451 = vector.broadcast %447 : f32 to vector<2x128xf32>
    %452 = arith.subf %3, %451 : vector<2x128xf32>
    %453 = math.absf %452 : vector<2x128xf32>
    %454 = arith.addf %450, %453 : vector<2x128xf32>
    %455 = arith.mulf %454, %454 : vector<2x128xf32>
    %cst_64 = arith.constant 9.99999997E-7 : f32
    %456 = vector.broadcast %cst_64 : f32 to vector<2x128xf32>
    %457 = arith.addf %454, %456 : vector<2x128xf32>
    %458 = math.log %457 : vector<2x128xf32>
    %459 = arith.mulf %455, %458 : vector<2x128xf32>
    %c20_65 = arith.constant 20 : index
    %460 = memref.load %arg3[%c20_65] : memref<50xf32, #tpu.memory_space<smem>>
    %461 = vector.broadcast %460 : f32 to vector<2x128xf32>
    %462 = arith.mulf %461, %459 : vector<2x128xf32>
    %463 = arith.addf %441, %462 : vector<2x128xf32>
    %c45 = arith.constant 45 : index
    %464 = memref.load %arg3[%c45] : memref<50xf32, #tpu.memory_space<smem>>
    %465 = vector.broadcast %464 : f32 to vector<2x128xf32>
    %466 = arith.mulf %465, %459 : vector<2x128xf32>
    %467 = arith.addf %445, %466 : vector<2x128xf32>
    %c42_66 = arith.constant 42 : index
    %468 = memref.load %arg2[%c42_66] : memref<50xf32, #tpu.memory_space<smem>>
    %c43_67 = arith.constant 43 : index
    %469 = memref.load %arg2[%c43_67] : memref<50xf32, #tpu.memory_space<smem>>
    %470 = vector.broadcast %468 : f32 to vector<2x128xf32>
    %471 = arith.subf %1, %470 : vector<2x128xf32>
    %472 = math.absf %471 : vector<2x128xf32>
    %473 = vector.broadcast %469 : f32 to vector<2x128xf32>
    %474 = arith.subf %3, %473 : vector<2x128xf32>
    %475 = math.absf %474 : vector<2x128xf32>
    %476 = arith.addf %472, %475 : vector<2x128xf32>
    %477 = arith.mulf %476, %476 : vector<2x128xf32>
    %cst_68 = arith.constant 9.99999997E-7 : f32
    %478 = vector.broadcast %cst_68 : f32 to vector<2x128xf32>
    %479 = arith.addf %476, %478 : vector<2x128xf32>
    %480 = math.log %479 : vector<2x128xf32>
    %481 = arith.mulf %477, %480 : vector<2x128xf32>
    %c21_69 = arith.constant 21 : index
    %482 = memref.load %arg3[%c21_69] : memref<50xf32, #tpu.memory_space<smem>>
    %483 = vector.broadcast %482 : f32 to vector<2x128xf32>
    %484 = arith.mulf %483, %481 : vector<2x128xf32>
    %485 = arith.addf %463, %484 : vector<2x128xf32>
    %c46 = arith.constant 46 : index
    %486 = memref.load %arg3[%c46] : memref<50xf32, #tpu.memory_space<smem>>
    %487 = vector.broadcast %486 : f32 to vector<2x128xf32>
    %488 = arith.mulf %487, %481 : vector<2x128xf32>
    %489 = arith.addf %467, %488 : vector<2x128xf32>
    %c44_70 = arith.constant 44 : index
    %490 = memref.load %arg2[%c44_70] : memref<50xf32, #tpu.memory_space<smem>>
    %c45_71 = arith.constant 45 : index
    %491 = memref.load %arg2[%c45_71] : memref<50xf32, #tpu.memory_space<smem>>
    %492 = vector.broadcast %490 : f32 to vector<2x128xf32>
    %493 = arith.subf %1, %492 : vector<2x128xf32>
    %494 = math.absf %493 : vector<2x128xf32>
    %495 = vector.broadcast %491 : f32 to vector<2x128xf32>
    %496 = arith.subf %3, %495 : vector<2x128xf32>
    %497 = math.absf %496 : vector<2x128xf32>
    %498 = arith.addf %494, %497 : vector<2x128xf32>
    %499 = arith.mulf %498, %498 : vector<2x128xf32>
    %cst_72 = arith.constant 9.99999997E-7 : f32
    %500 = vector.broadcast %cst_72 : f32 to vector<2x128xf32>
    %501 = arith.addf %498, %500 : vector<2x128xf32>
    %502 = math.log %501 : vector<2x128xf32>
    %503 = arith.mulf %499, %502 : vector<2x128xf32>
    %c22_73 = arith.constant 22 : index
    %504 = memref.load %arg3[%c22_73] : memref<50xf32, #tpu.memory_space<smem>>
    %505 = vector.broadcast %504 : f32 to vector<2x128xf32>
    %506 = arith.mulf %505, %503 : vector<2x128xf32>
    %507 = arith.addf %485, %506 : vector<2x128xf32>
    %c47 = arith.constant 47 : index
    %508 = memref.load %arg3[%c47] : memref<50xf32, #tpu.memory_space<smem>>
    %509 = vector.broadcast %508 : f32 to vector<2x128xf32>
    %510 = arith.mulf %509, %503 : vector<2x128xf32>
    %511 = arith.addf %489, %510 : vector<2x128xf32>
    %c46_74 = arith.constant 46 : index
    %512 = memref.load %arg2[%c46_74] : memref<50xf32, #tpu.memory_space<smem>>
    %c47_75 = arith.constant 47 : index
    %513 = memref.load %arg2[%c47_75] : memref<50xf32, #tpu.memory_space<smem>>
    %514 = vector.broadcast %512 : f32 to vector<2x128xf32>
    %515 = arith.subf %1, %514 : vector<2x128xf32>
    %516 = math.absf %515 : vector<2x128xf32>
    %517 = vector.broadcast %513 : f32 to vector<2x128xf32>
    %518 = arith.subf %3, %517 : vector<2x128xf32>
    %519 = math.absf %518 : vector<2x128xf32>
    %520 = arith.addf %516, %519 : vector<2x128xf32>
    %521 = arith.mulf %520, %520 : vector<2x128xf32>
    %cst_76 = arith.constant 9.99999997E-7 : f32
    %522 = vector.broadcast %cst_76 : f32 to vector<2x128xf32>
    %523 = arith.addf %520, %522 : vector<2x128xf32>
    %524 = math.log %523 : vector<2x128xf32>
    %525 = arith.mulf %521, %524 : vector<2x128xf32>
    %c23_77 = arith.constant 23 : index
    %526 = memref.load %arg3[%c23_77] : memref<50xf32, #tpu.memory_space<smem>>
    %527 = vector.broadcast %526 : f32 to vector<2x128xf32>
    %528 = arith.mulf %527, %525 : vector<2x128xf32>
    %529 = arith.addf %507, %528 : vector<2x128xf32>
    %c48 = arith.constant 48 : index
    %530 = memref.load %arg3[%c48] : memref<50xf32, #tpu.memory_space<smem>>
    %531 = vector.broadcast %530 : f32 to vector<2x128xf32>
    %532 = arith.mulf %531, %525 : vector<2x128xf32>
    %533 = arith.addf %511, %532 : vector<2x128xf32>
    %c48_78 = arith.constant 48 : index
    %534 = memref.load %arg2[%c48_78] : memref<50xf32, #tpu.memory_space<smem>>
    %c49 = arith.constant 49 : index
    %535 = memref.load %arg2[%c49] : memref<50xf32, #tpu.memory_space<smem>>
    %536 = vector.broadcast %534 : f32 to vector<2x128xf32>
    %537 = arith.subf %1, %536 : vector<2x128xf32>
    %538 = math.absf %537 : vector<2x128xf32>
    %539 = vector.broadcast %535 : f32 to vector<2x128xf32>
    %540 = arith.subf %3, %539 : vector<2x128xf32>
    %541 = math.absf %540 : vector<2x128xf32>
    %542 = arith.addf %538, %541 : vector<2x128xf32>
    %543 = arith.mulf %542, %542 : vector<2x128xf32>
    %cst_79 = arith.constant 9.99999997E-7 : f32
    %544 = vector.broadcast %cst_79 : f32 to vector<2x128xf32>
    %545 = arith.addf %542, %544 : vector<2x128xf32>
    %546 = math.log %545 : vector<2x128xf32>
    %547 = arith.mulf %543, %546 : vector<2x128xf32>
    %c24_80 = arith.constant 24 : index
    %548 = memref.load %arg3[%c24_80] : memref<50xf32, #tpu.memory_space<smem>>
    %549 = vector.broadcast %548 : f32 to vector<2x128xf32>
    %550 = arith.mulf %549, %547 : vector<2x128xf32>
    %551 = arith.addf %529, %550 : vector<2x128xf32>
    %c49_81 = arith.constant 49 : index
    %552 = memref.load %arg3[%c49_81] : memref<50xf32, #tpu.memory_space<smem>>
    %553 = vector.broadcast %552 : f32 to vector<2x128xf32>
    %554 = arith.mulf %553, %547 : vector<2x128xf32>
    %555 = arith.addf %533, %554 : vector<2x128xf32>
    %c0_82 = arith.constant 0 : index
    %556 = memref.load %arg1[%c0_82] : memref<12xf32, #tpu.memory_space<smem>>
    %c1_83 = arith.constant 1 : index
    %557 = memref.load %arg1[%c1_83] : memref<12xf32, #tpu.memory_space<smem>>
    %c2_84 = arith.constant 2 : index
    %558 = memref.load %arg1[%c2_84] : memref<12xf32, #tpu.memory_space<smem>>
    %c3_85 = arith.constant 3 : index
    %559 = memref.load %arg1[%c3_85] : memref<12xf32, #tpu.memory_space<smem>>
    %c4_86 = arith.constant 4 : index
    %560 = memref.load %arg1[%c4_86] : memref<12xf32, #tpu.memory_space<smem>>
    %c5_87 = arith.constant 5 : index
    %561 = memref.load %arg1[%c5_87] : memref<12xf32, #tpu.memory_space<smem>>
    %562 = vector.broadcast %556 : f32 to vector<2x128xf32>
    %563 = arith.mulf %562, %1 : vector<2x128xf32>
    %564 = vector.broadcast %557 : f32 to vector<2x128xf32>
    %565 = arith.mulf %564, %3 : vector<2x128xf32>
    %566 = arith.addf %563, %565 : vector<2x128xf32>
    %567 = vector.broadcast %558 : f32 to vector<2x128xf32>
    %568 = arith.addf %566, %567 : vector<2x128xf32>
    %569 = arith.addf %568, %551 : vector<2x128xf32>
    %c0_88 = arith.constant 0 : index
    %c0_89 = arith.constant 0 : index
    %c0_90 = arith.constant 0 : index
    %c0_91 = arith.constant 0 : index
    %570 = vector.load %arg5[%c0_88, %c0_89, %c0_90, %c0_91] : memref<2x2x2x128xf32, #tpu.memory_space<vmem>>, vector<1x1x2x128xf32>
    %571 = vector.shape_cast %570 : vector<1x1x2x128xf32> to vector<2x128xf32>
    %572 = vector.shape_cast %569 : vector<2x128xf32> to vector<1x1x2x128xf32>
    tpu.vector_store %arg5[%c0_88, %c0_89, %c0_90, %c0_91], %572 {strides = array<i32>} : memref<2x2x2x128xf32, #tpu.memory_space<vmem>>, vector<1x1x2x128xf32>,
    %573 = vector.broadcast %559 : f32 to vector<2x128xf32>
    %574 = arith.mulf %573, %1 : vector<2x128xf32>
    %575 = vector.broadcast %560 : f32 to vector<2x128xf32>
    %576 = arith.mulf %575, %3 : vector<2x128xf32>
    %577 = arith.addf %574, %576 : vector<2x128xf32>
    %578 = vector.broadcast %561 : f32 to vector<2x128xf32>
    %579 = arith.addf %577, %578 : vector<2x128xf32>
    %580 = arith.addf %579, %551 : vector<2x128xf32>
    %c0_92 = arith.constant 0 : index
    %c1_93 = arith.constant 1 : index
    %c0_94 = arith.constant 0 : index
    %c0_95 = arith.constant 0 : index
    %581 = vector.load %arg5[%c0_92, %c1_93, %c0_94, %c0_95] : memref<2x2x2x128xf32, #tpu.memory_space<vmem>>, vector<1x1x2x128xf32>
    %582 = vector.shape_cast %581 : vector<1x1x2x128xf32> to vector<2x128xf32>
    %583 = vector.shape_cast %580 : vector<2x128xf32> to vector<1x1x2x128xf32>
    tpu.vector_store %arg5[%c0_92, %c1_93, %c0_94, %c0_95], %583 {strides = array<i32>} : memref<2x2x2x128xf32, #tpu.memory_space<vmem>>, vector<1x1x2x128xf32>,
    %c6_96 = arith.constant 6 : index
    %584 = memref.load %arg1[%c6_96] : memref<12xf32, #tpu.memory_space<smem>>
    %c7_97 = arith.constant 7 : index
    %585 = memref.load %arg1[%c7_97] : memref<12xf32, #tpu.memory_space<smem>>
    %c8_98 = arith.constant 8 : index
    %586 = memref.load %arg1[%c8_98] : memref<12xf32, #tpu.memory_space<smem>>
    %c9_99 = arith.constant 9 : index
    %587 = memref.load %arg1[%c9_99] : memref<12xf32, #tpu.memory_space<smem>>
    %c10_100 = arith.constant 10 : index
    %588 = memref.load %arg1[%c10_100] : memref<12xf32, #tpu.memory_space<smem>>
    %c11_101 = arith.constant 11 : index
    %589 = memref.load %arg1[%c11_101] : memref<12xf32, #tpu.memory_space<smem>>
    %590 = vector.broadcast %584 : f32 to vector<2x128xf32>
    %591 = arith.mulf %590, %1 : vector<2x128xf32>
    %592 = vector.broadcast %585 : f32 to vector<2x128xf32>
    %593 = arith.mulf %592, %3 : vector<2x128xf32>
    %594 = arith.addf %591, %593 : vector<2x128xf32>
    %595 = vector.broadcast %586 : f32 to vector<2x128xf32>
    %596 = arith.addf %594, %595 : vector<2x128xf32>
    %597 = arith.addf %596, %555 : vector<2x128xf32>
    %c1_102 = arith.constant 1 : index
    %c0_103 = arith.constant 0 : index
    %c0_104 = arith.constant 0 : index
    %c0_105 = arith.constant 0 : index
    %598 = vector.load %arg5[%c1_102, %c0_103, %c0_104, %c0_105] : memref<2x2x2x128xf32, #tpu.memory_space<vmem>>, vector<1x1x2x128xf32>
    %599 = vector.shape_cast %598 : vector<1x1x2x128xf32> to vector<2x128xf32>
    %600 = vector.shape_cast %597 : vector<2x128xf32> to vector<1x1x2x128xf32>
    tpu.vector_store %arg5[%c1_102, %c0_103, %c0_104, %c0_105], %600 {strides = array<i32>} : memref<2x2x2x128xf32, #tpu.memory_space<vmem>>, vector<1x1x2x128xf32>,
    %601 = vector.broadcast %587 : f32 to vector<2x128xf32>
    %602 = arith.mulf %601, %1 : vector<2x128xf32>
    %603 = vector.broadcast %588 : f32 to vector<2x128xf32>
    %604 = arith.mulf %603, %3 : vector<2x128xf32>
    %605 = arith.addf %602, %604 : vector<2x128xf32>
    %606 = vector.broadcast %589 : f32 to vector<2x128xf32>
    %607 = arith.addf %605, %606 : vector<2x128xf32>
    %608 = arith.addf %607, %555 : vector<2x128xf32>
    %c1_106 = arith.constant 1 : index
    %c1_107 = arith.constant 1 : index
    %c0_108 = arith.constant 0 : index
    %c0_109 = arith.constant 0 : index
    %609 = vector.load %arg5[%c1_106, %c1_107, %c0_108, %c0_109] : memref<2x2x2x128xf32, #tpu.memory_space<vmem>>, vector<1x1x2x128xf32>
    %610 = vector.shape_cast %609 : vector<1x1x2x128xf32> to vector<2x128xf32>
    %611 = vector.shape_cast %608 : vector<2x128xf32> to vector<1x1x2x128xf32>
    tpu.vector_store %arg5[%c1_106, %c1_107, %c0_108, %c0_109], %611 {strides = array<i32>} : memref<2x2x2x128xf32, #tpu.memory_space<vmem>>, vector<1x1x2x128xf32>,
    return
  }
  func.func @transform_0(%arg0: i32) -> i32 {
    %c0_i32 = arith.constant 0 : i32
    %c0_i32_0 = arith.constant 0 : i32
    return %c0_i32 : i32
  }
  func.func @transform_1(%arg0: i32) -> i32 {
    %c0_i32 = arith.constant 0 : i32
    %c0_i32_0 = arith.constant 0 : i32
    return %c0_i32 : i32
  }
  func.func @transform_2(%arg0: i32) -> i32 {
    %c0_i32 = arith.constant 0 : i32
    %c0_i32_0 = arith.constant 0 : i32
    return %c0_i32 : i32
  }
  func.func @transform_3(%arg0: i32) -> (i32, i32, i32) {
    %c0_i32 = arith.constant 0 : i32
    %c0_i32_0 = arith.constant 0 : i32
    %c0_i32_1 = arith.constant 0 : i32
    return %c0_i32, %arg0, %c0_i32_0 : i32, i32, i32
  }
  func.func @transform_4(%arg0: i32) -> (i32, i32, i32, i32) {
    %c0_i32 = arith.constant 0 : i32
    %c0_i32_0 = arith.constant 0 : i32
    %c0_i32_1 = arith.constant 0 : i32
    %c0_i32_2 = arith.constant 0 : i32
    return %c0_i32, %c0_i32_0, %arg0, %c0_i32_1 : i32, i32, i32, i32
  }
}

</mosaic_0001>

<llo_original>
// kernel: tpu_custom_call.1
$region0: #{tpu_custom_call.1}
  #allocation0 [shape = 'u32[]', space=smem, size = 0x4, offset = 0x4, fixed_abs, tag = 'smem constant byte address 0x4 - core index']
  #allocation1 [shape = 'u32[72,128]{1,0:T(1,128)}', space=vmem, size = 0x9000, scoped, tag = 'internal scratch']
  %s0 = inlined_call_operand.hbm [shape: f32[12], index: 0, kind: input, shape index: {}]
  %s1 = inlined_call_operand.hbm [shape: f32[50], index: 1, kind: input, shape index: {}]
  %s2 = inlined_call_operand.vmem [shape: f32[50], index: 2, kind: input, shape index: {}]
  %s3 = inlined_call_operand.hbm [shape: f32[2,2,128], index: 3, kind: input, shape index: {}]
  %s4 = inlined_call_operand.hbm [shape: f32[2,2,2,128], index: 4, kind: output, shape index: {}]
  %s5 = sld [smem:[#allocation0]]
  $region42: #{tpu_custom_call.1} parent=0
    _
  %s7 = ssub.s32 1, %s5
  %s8 = scalar_select 0, %s7, %s5
  $region1: #{tpu_custom_call.1} parent=0
    #allocation2 [shape = 'u8[512]{0}', space=smem, size = 0x200, scoped, tag = 'input window, operand 0, single buffered']
    #allocation3 [shape = 's32[1]{0}', space=sflag, size = 0x4, scoped, tag = 'scoped memory for tpu_custom_call.1']
    #allocation4 [shape = 's32[1]{0}', space=sflag, size = 0x4, scoped, tag = 'scoped memory for tpu_custom_call.1']
    #allocation5 [shape = 's32[1]{0}', space=sflag, size = 0x4, scoped, tag = 'scoped memory for tpu_custom_call.1']
    #allocation6 [shape = 's32[1]{0}', space=sflag, size = 0x4, scoped, tag = 'scoped memory for tpu_custom_call.1']
    #allocation7 [shape = 'u8[512]{0}', space=smem, size = 0x200, scoped, tag = 'input window, operand 1, single buffered']
    #allocation8 [shape = 's32[1]{0}', space=sflag, size = 0x4, scoped, tag = 'scoped memory for tpu_custom_call.1']
    #allocation9 [shape = 'u8[512]{0}', space=smem, size = 0x200, scoped, tag = 'input window, operand 2, single buffered']
    #allocation10 [shape = 'u8[2048]{0}', space=vmem, size = 0x800, scoped, tag = 'input window, operand 3, single buffered']
    #allocation11 [shape = 'u8[4096]{0}', space=vmem, size = 0x1000, scoped, tag = 'output window, operand 0, single buffered']
    %9 = vsyncpa [#allocation5], 0
    %10 = vsyncpa [#allocation8], 0
    %11 = vsyncpa [#allocation6], 0
    %12 = vsyncpa [#allocation3], 0
    %13 = vsyncpa [#allocation4], 0
    // Predicated region
    $region2: #{tpu_custom_call.1} parent=1 // pred_check
      _
    $region3: #{tpu_custom_call.1} parent=1 // pred_check_branch
      %15 = sbr.rel (0) target = $region5
    $region4: #{tpu_custom_call.1} parent=1 // pred_region
      %17 = vsyncadd [#allocation5], 0
      %s19 = sshll.u32 %s0, 4
      %s20 = int_to_ptr.hbm [resolvable:$true] %s19
      %22 = dma.hbm_to_smem %s20, 16, [#allocation2], [#allocation5]
    $region5: #{tpu_custom_call.1} parent=1 // pred_fallthru
      _
    // Predicated region
    $region6: #{tpu_custom_call.1} parent=1 // pred_check
      _
    $region7: #{tpu_custom_call.1} parent=1 // pred_check_branch
      %24 = sbr.rel (0) target = $region9
    $region8: #{tpu_custom_call.1} parent=1 // pred_region
      %26 = vsyncadd [#allocation8], 0
      %s28 = sshll.u32 %s1, 4
      %s29 = int_to_ptr.hbm [resolvable:$true] %s28
      %31 = dma.hbm_to_smem %s29, 16, [#allocation7], [#allocation8]
    $region9: #{tpu_custom_call.1} parent=1 // pred_fallthru
      _
    // Predicated region
    $region10: #{tpu_custom_call.1} parent=1 // pred_check
      _
    $region11: #{tpu_custom_call.1} parent=1 // pred_check_branch
      %33 = sbr.rel (0) target = $region13
    $region12: #{tpu_custom_call.1} parent=1 // pred_region
      %35 = vsyncadd [#allocation6], 0
      %s37 = sshll.u32 %s2, 4
      %s38 = int_to_ptr.vmem [resolvable:$true] %s37
      %40 = dma.vmem_to_smem %s38, 16, [#allocation9], [#allocation6]
    $region13: #{tpu_custom_call.1} parent=1 // pred_fallthru
      _
    // Predicated region
    $region14: #{tpu_custom_call.1} parent=1 // pred_check
      _
    $region15: #{tpu_custom_call.1} parent=1 // pred_check_branch
      %42 = sbr.rel (0) target = $region17
    $region16: #{tpu_custom_call.1} parent=1 // pred_region
      %44 = vsyncadd [#allocation3], 0
      %s45 = sshll.u32 %s3, 4
      %s46 = int_to_ptr.hbm [resolvable:$true] %s45
      %s47 = sshll.u32 [#allocation10], 4
      %s48 = int_to_ptr.vmem [resolvable:$true] %s47
      %53 = dma.hbm_to_vmem [thread:$0]  %s46, 64, %s48, [#allocation3], 32, 32, 2
    $region17: #{tpu_custom_call.1} parent=1 // pred_fallthru
      _
    // Predicated region
    $region18: #{tpu_custom_call.1} parent=1 // pred_check
      _
    $region19: #{tpu_custom_call.1} parent=1 // pred_check_branch
      %55 = sbr.rel (0) target = $region21
    $region20: #{tpu_custom_call.1} parent=1 // pred_region
      %57 = dma.done [#allocation5], 16
    $region21: #{tpu_custom_call.1} parent=1 // pred_fallthru
      _
    // Predicated region
    $region22: #{tpu_custom_call.1} parent=1 // pred_check
      _
    $region23: #{tpu_custom_call.1} parent=1 // pred_check_branch
      %59 = sbr.rel (0) target = $region25
    $region24: #{tpu_custom_call.1} parent=1 // pred_region
      %61 = dma.done [#allocation8], 16
    $region25: #{tpu_custom_call.1} parent=1 // pred_fallthru
      _
    // Predicated region
    $region26: #{tpu_custom_call.1} parent=1 // pred_check
      _
    $region27: #{tpu_custom_call.1} parent=1 // pred_check_branch
      %63 = sbr.rel (0) target = $region29
    $region28: #{tpu_custom_call.1} parent=1 // pred_region
      %65 = dma.done [#allocation6], 16
    $region29: #{tpu_custom_call.1} parent=1 // pred_fallthru
      _
    // Predicated region
    $region30: #{tpu_custom_call.1} parent=1 // pred_check
      _
    $region31: #{tpu_custom_call.1} parent=1 // pred_check_branch
      %67 = sbr.rel (0) target = $region33
    $region32: #{tpu_custom_call.1} parent=1 // pred_region
      %69 = dma.done [#allocation3], 64
    $region33: #{tpu_custom_call.1} parent=1 // pred_fallthru
      _
    %70 = sfence
    %v71 = vld [vmem:[#allocation10] sm:$0x3]
    %s72 = scalar_lea.vmem [#allocation10], 2
    %v73 = vld [vmem:[%s72] sm:$0x3]
    %s74 = sld [smem:[#allocation7]]
    %s75 = sld [smem:[#allocation7 + $0x1]]
    %v76 = vstv %s74
    %v77 = vsub.f32 %v71, %v76
    %v78 = vand.u32 2147483647, %v77
    %v79 = vstv %s75
    %v80 = vsub.f32 %v73, %v79
    %v81 = vand.u32 2147483647, %v80
    %v82 = vadd.f32 %v78, %v81
    %v83 = vmul.f32 %v82, %v82
    %v84 = vadd.f32 %v82, 1e-06
    %v85 = vlog2.pop %v84
    %v86 = vmul.f32 %v85, 0.6931472
    %v87 = vmul.f32 %v83, %v86
    %s88 = sld [smem:[#allocation9]]
    %v89 = vstv %s88
    %v90 = vmul.f32 %v89, %v87
    %v91 = vadd.f32 %v90, 0.0
    %s92 = sld [smem:[#allocation9 + $0x19]]
    %v93 = vstv %s92
    %v94 = vmul.f32 %v93, %v87
    %v95 = vadd.f32 %v94, 0.0
    %s96 = sld [smem:[#allocation7 + $0x2]]
    %s97 = sld [smem:[#allocation7 + $0x3]]
    %v98 = vstv %s96
    %v99 = vsub.f32 %v71, %v98
    %v100 = vand.u32 2147483647, %v99
    %v101 = vstv %s97
    %v102 = vsub.f32 %v73, %v101
    %v103 = vand.u32 2147483647, %v102
    %v104 = vadd.f32 %v100, %v103
    %v105 = vmul.f32 %v104, %v104
    %v106 = vadd.f32 %v104, 1e-06
    %v107 = vlog2.pop %v106
    %v108 = vmul.f32 %v107, 0.6931472
    %v109 = vmul.f32 %v105, %v108
    %s110 = sld [smem:[#allocation9 + $0x1]]
    %v111 = vstv %s110
    %v112 = vmul.f32 %v111, %v109
    %v113 = vadd.f32 %v91, %v112
    %s114 = sld [smem:[#allocation9 + $0x1a]]
    %v115 = vstv %s114
    %v116 = vmul.f32 %v115, %v109
    %v117 = vadd.f32 %v95, %v116
    %s118 = sld [smem:[#allocation7 + $0x4]]
    %s119 = sld [smem:[#allocation7 + $0x5]]
    %v120 = vstv %s118
    %v121 = vsub.f32 %v71, %v120
    %v122 = vand.u32 2147483647, %v121
    %v123 = vstv %s119
    %v124 = vsub.f32 %v73, %v123
    %v125 = vand.u32 2147483647, %v124
    %v126 = vadd.f32 %v122, %v125
    %v127 = vmul.f32 %v126, %v126
    %v128 = vadd.f32 %v126, 1e-06
    %v129 = vlog2.pop %v128
    %v130 = vmul.f32 %v129, 0.6931472
    %v131 = vmul.f32 %v127, %v130
    %s132 = sld [smem:[#allocation9 + $0x2]]
    %v133 = vstv %s132
    %v134 = vmul.f32 %v133, %v131
    %v135 = vadd.f32 %v113, %v134
    %s136 = sld [smem:[#allocation9 + $0x1b]]
    %v137 = vstv %s136
    %v138 = vmul.f32 %v137, %v131
    %v139 = vadd.f32 %v117, %v138
    %s140 = sld [smem:[#allocation7 + $0x6]]
    %s141 = sld [smem:[#allocation7 + $0x7]]
    %v142 = vstv %s140
    %v143 = vsub.f32 %v71, %v142
    %v144 = vand.u32 2147483647, %v143
    %v145 = vstv %s141
    %v146 = vsub.f32 %v73, %v145
    %v147 = vand.u32 2147483647, %v146
    %v148 = vadd.f32 %v144, %v147
    %v149 = vmul.f32 %v148, %v148
    %v150 = vadd.f32 %v148, 1e-06
    %v151 = vlog2.pop %v150
    %v152 = vmul.f32 %v151, 0.6931472
    %v153 = vmul.f32 %v149, %v152
    %s154 = sld [smem:[#allocation9 + $0x3]]
    %v155 = vstv %s154
    %v156 = vmul.f32 %v155, %v153
    %v157 = vadd.f32 %v135, %v156
    %s158 = sld [smem:[#allocation9 + $0x1c]]
    %v159 = vstv %s158
    %v160 = vmul.f32 %v159, %v153
    %v161 = vadd.f32 %v139, %v160
    %s162 = sld [smem:[#allocation7 + $0x8]]
    %s163 = sld [smem:[#allocation7 + $0x9]]
    %v164 = vstv %s162
    %v165 = vsub.f32 %v71, %v164
    %v166 = vand.u32 2147483647, %v165
    %v167 = vstv %s163
    %v168 = vsub.f32 %v73, %v167
    %v169 = vand.u32 2147483647, %v168
    %v170 = vadd.f32 %v166, %v169
    %v171 = vmul.f32 %v170, %v170
    %v172 = vadd.f32 %v170, 1e-06
    %v173 = vlog2.pop %v172
    %v174 = vmul.f32 %v173, 0.6931472
    %v175 = vmul.f32 %v171, %v174
    %s176 = sld [smem:[#allocation9 + $0x4]]
    %v177 = vstv %s176
    %v178 = vmul.f32 %v177, %v175
    %v179 = vadd.f32 %v157, %v178
    %s180 = sld [smem:[#allocation9 + $0x1d]]
    %v181 = vstv %s180
    %v182 = vmul.f32 %v181, %v175
    %v183 = vadd.f32 %v161, %v182
    %s184 = sld [smem:[#allocation7 + $0xa]]
    %s185 = sld [smem:[#allocation7 + $0xb]]
    %v186 = vstv %s184
    %v187 = vsub.f32 %v71, %v186
    %v188 = vand.u32 2147483647, %v187
    %v189 = vstv %s185
    %v190 = vsub.f32 %v73, %v189
    %v191 = vand.u32 2147483647, %v190
    %v192 = vadd.f32 %v188, %v191
    %v193 = vmul.f32 %v192, %v192
    %v194 = vadd.f32 %v192, 1e-06
    %v195 = vlog2.pop %v194
    %v196 = vmul.f32 %v195, 0.6931472
    %v197 = vmul.f32 %v193, %v196
    %s198 = sld [smem:[#allocation9 + $0x5]]
    %v199 = vstv %s198
    %v200 = vmul.f32 %v199, %v197
    %v201 = vadd.f32 %v179, %v200
    %s202 = sld [smem:[#allocation9 + $0x1e]]
    %v203 = vstv %s202
    %v204 = vmul.f32 %v203, %v197
    %v205 = vadd.f32 %v183, %v204
    %s206 = sld [smem:[#allocation7 + $0xc]]
    %s207 = sld [smem:[#allocation7 + $0xd]]
    %v208 = vstv %s206
    %v209 = vsub.f32 %v71, %v208
    %v210 = vand.u32 2147483647, %v209
    %v211 = vstv %s207
    %v212 = vsub.f32 %v73, %v211
    %v213 = vand.u32 2147483647, %v212
    %v214 = vadd.f32 %v210, %v213
    %v215 = vmul.f32 %v214, %v214
    %v216 = vadd.f32 %v214, 1e-06
    %v217 = vlog2.pop %v216
    %v218 = vmul.f32 %v217, 0.6931472
    %v219 = vmul.f32 %v215, %v218
    %s220 = sld [smem:[#allocation9 + $0x6]]
    %v221 = vstv %s220
    %v222 = vmul.f32 %v221, %v219
    %v223 = vadd.f32 %v201, %v222
    %s224 = sld [smem:[#allocation9 + $0x1f]]
    %v225 = vstv %s224
    %v226 = vmul.f32 %v225, %v219
    %v227 = vadd.f32 %v205, %v226
    %s228 = sld [smem:[#allocation7 + $0xe]]
    %s229 = sld [smem:[#allocation7 + $0xf]]
    %v230 = vstv %s228
    %v231 = vsub.f32 %v71, %v230
    %v232 = vand.u32 2147483647, %v231
    %v233 = vstv %s229
    %v234 = vsub.f32 %v73, %v233
    %v235 = vand.u32 2147483647, %v234
    %v236 = vadd.f32 %v232, %v235
    %v237 = vmul.f32 %v236, %v236
    %v238 = vadd.f32 %v236, 1e-06
    %v239 = vlog2.pop %v238
    %v240 = vmul.f32 %v239, 0.6931472
    %v241 = vmul.f32 %v237, %v240
    %s242 = sld [smem:[#allocation9 + $0x7]]
    %v243 = vstv %s242
    %v244 = vmul.f32 %v243, %v241
    %v245 = vadd.f32 %v223, %v244
    %s246 = sld [smem:[#allocation9 + $0x20]]
    %v247 = vstv %s246
    %v248 = vmul.f32 %v247, %v241
    %v249 = vadd.f32 %v227, %v248
    %s250 = sld [smem:[#allocation7 + $0x10]]
    %s251 = sld [smem:[#allocation7 + $0x11]]
    %v252 = vstv %s250
    %v253 = vsub.f32 %v71, %v252
    %v254 = vand.u32 2147483647, %v253
    %v255 = vstv %s251
    %v256 = vsub.f32 %v73, %v255
    %v257 = vand.u32 2147483647, %v256
    %v258 = vadd.f32 %v254, %v257
    %v259 = vmul.f32 %v258, %v258
    %v260 = vadd.f32 %v258, 1e-06
    %v261 = vlog2.pop %v260
    %v262 = vmul.f32 %v261, 0.6931472
    %v263 = vmul.f32 %v259, %v262
    %s264 = sld [smem:[#allocation9 + $0x8]]
    %v265 = vstv %s264
    %v266 = vmul.f32 %v265, %v263
    %v267 = vadd.f32 %v245, %v266
    %s268 = sld [smem:[#allocation9 + $0x21]]
    %v269 = vstv %s268
    %v270 = vmul.f32 %v269, %v263
    %v271 = vadd.f32 %v249, %v270
    %s272 = sld [smem:[#allocation7 + $0x12]]
    %s273 = sld [smem:[#allocation7 + $0x13]]
    %v274 = vstv %s272
    %v275 = vsub.f32 %v71, %v274
    %v276 = vand.u32 2147483647, %v275
    %v277 = vstv %s273
    %v278 = vsub.f32 %v73, %v277
    %v279 = vand.u32 2147483647, %v278
    %v280 = vadd.f32 %v276, %v279
    %v281 = vmul.f32 %v280, %v280
    %v282 = vadd.f32 %v280, 1e-06
    %v283 = vlog2.pop %v282
    %v284 = vmul.f32 %v283, 0.6931472
    %v285 = vmul.f32 %v281, %v284
    %s286 = sld [smem:[#allocation9 + $0x9]]
    %v287 = vstv %s286
    %v288 = vmul.f32 %v287, %v285
    %v289 = vadd.f32 %v267, %v288
    %s290 = sld [smem:[#allocation9 + $0x22]]
    %v291 = vstv %s290
    %v292 = vmul.f32 %v291, %v285
    %v293 = vadd.f32 %v271, %v292
    %s294 = sld [smem:[#allocation7 + $0x14]]
    %s295 = sld [smem:[#allocation7 + $0x15]]
    %v296 = vstv %s294
    %v297 = vsub.f32 %v71, %v296
    %v298 = vand.u32 2147483647, %v297
    %v299 = vstv %s295
    %v300 = vsub.f32 %v73, %v299
    %v301 = vand.u32 2147483647, %v300
    %v302 = vadd.f32 %v298, %v301
    %v303 = vmul.f32 %v302, %v302
    %v304 = vadd.f32 %v302, 1e-06
    %v305 = vlog2.pop %v304
    %v306 = vmul.f32 %v305, 0.6931472
    %v307 = vmul.f32 %v303, %v306
    %s308 = sld [smem:[#allocation9 + $0xa]]
    %v309 = vstv %s308
    %v310 = vmul.f32 %v309, %v307
    %v311 = vadd.f32 %v289, %v310
    %s312 = sld [smem:[#allocation9 + $0x23]]
    %v313 = vstv %s312
    %v314 = vmul.f32 %v313, %v307
    %v315 = vadd.f32 %v293, %v314
    %s316 = sld [smem:[#allocation7 + $0x16]]
    %s317 = sld [smem:[#allocation7 + $0x17]]
    %v318 = vstv %s316
    %v319 = vsub.f32 %v71, %v318
    %v320 = vand.u32 2147483647, %v319
    %v321 = vstv %s317
    %v322 = vsub.f32 %v73, %v321
    %v323 = vand.u32 2147483647, %v322
    %v324 = vadd.f32 %v320, %v323
    %v325 = vmul.f32 %v324, %v324
    %v326 = vadd.f32 %v324, 1e-06
    %v327 = vlog2.pop %v326
    %v328 = vmul.f32 %v327, 0.6931472
    %v329 = vmul.f32 %v325, %v328
    %s330 = sld [smem:[#allocation9 + $0xb]]
    %v331 = vstv %s330
    %v332 = vmul.f32 %v331, %v329
    %v333 = vadd.f32 %v311, %v332
    %s334 = sld [smem:[#allocation9 + $0x24]]
    %v335 = vstv %s334
    %v336 = vmul.f32 %v335, %v329
    %v337 = vadd.f32 %v315, %v336
    %s338 = sld [smem:[#allocation7 + $0x18]]
    %s339 = sld [smem:[#allocation7 + $0x19]]
    %v340 = vstv %s338
    %v341 = vsub.f32 %v71, %v340
    %v342 = vand.u32 2147483647, %v341
    %v343 = vstv %s339
    %v344 = vsub.f32 %v73, %v343
    %v345 = vand.u32 2147483647, %v344
    %v346 = vadd.f32 %v342, %v345
    %v347 = vmul.f32 %v346, %v346
    %v348 = vadd.f32 %v346, 1e-06
    %v349 = vlog2.pop %v348
    %v350 = vmul.f32 %v349, 0.6931472
    %v351 = vmul.f32 %v347, %v350
    %s352 = sld [smem:[#allocation9 + $0xc]]
    %v353 = vstv %s352
    %v354 = vmul.f32 %v353, %v351
    %v355 = vadd.f32 %v333, %v354
    %s356 = sld [smem:[#allocation9 + $0x25]]
    %v357 = vstv %s356
    %v358 = vmul.f32 %v357, %v351
    %v359 = vadd.f32 %v337, %v358
    %s360 = sld [smem:[#allocation7 + $0x1a]]
    %s361 = sld [smem:[#allocation7 + $0x1b]]
    %v362 = vstv %s360
    %v363 = vsub.f32 %v71, %v362
    %v364 = vand.u32 2147483647, %v363
    %v365 = vstv %s361
    %v366 = vsub.f32 %v73, %v365
    %v367 = vand.u32 2147483647, %v366
    %v368 = vadd.f32 %v364, %v367
    %v369 = vmul.f32 %v368, %v368
    %v370 = vadd.f32 %v368, 1e-06
    %v371 = vlog2.pop %v370
    %v372 = vmul.f32 %v371, 0.6931472
    %v373 = vmul.f32 %v369, %v372
    %s374 = sld [smem:[#allocation9 + $0xd]]
    %v375 = vstv %s374
    %v376 = vmul.f32 %v375, %v373
    %v377 = vadd.f32 %v355, %v376
    %s378 = sld [smem:[#allocation9 + $0x26]]
    %v379 = vstv %s378
    %v380 = vmul.f32 %v379, %v373
    %v381 = vadd.f32 %v359, %v380
    %s382 = sld [smem:[#allocation7 + $0x1c]]
    %s383 = sld [smem:[#allocation7 + $0x1d]]
    %v384 = vstv %s382
    %v385 = vsub.f32 %v71, %v384
    %v386 = vand.u32 2147483647, %v385
    %v387 = vstv %s383
    %v388 = vsub.f32 %v73, %v387
    %v389 = vand.u32 2147483647, %v388
    %v390 = vadd.f32 %v386, %v389
    %v391 = vmul.f32 %v390, %v390
    %v392 = vadd.f32 %v390, 1e-06
    %v393 = vlog2.pop %v392
    %v394 = vmul.f32 %v393, 0.6931472
    %v395 = vmul.f32 %v391, %v394
    %s396 = sld [smem:[#allocation9 + $0xe]]
    %v397 = vstv %s396
    %v398 = vmul.f32 %v397, %v395
    %v399 = vadd.f32 %v377, %v398
    %s400 = sld [smem:[#allocation9 + $0x27]]
    %v401 = vstv %s400
    %v402 = vmul.f32 %v401, %v395
    %v403 = vadd.f32 %v381, %v402
    %s404 = sld [smem:[#allocation7 + $0x1e]]
    %s405 = sld [smem:[#allocation7 + $0x1f]]
    %v406 = vstv %s404
    %v407 = vsub.f32 %v71, %v406
    %v408 = vand.u32 2147483647, %v407
    %v409 = vstv %s405
    %v410 = vsub.f32 %v73, %v409
    %v411 = vand.u32 2147483647, %v410
    %v412 = vadd.f32 %v408, %v411
    %v413 = vmul.f32 %v412, %v412
    %v414 = vadd.f32 %v412, 1e-06
    %v415 = vlog2.pop %v414
    %v416 = vmul.f32 %v415, 0.6931472
    %v417 = vmul.f32 %v413, %v416
    %s418 = sld [smem:[#allocation9 + $0xf]]
    %v419 = vstv %s418
    %v420 = vmul.f32 %v419, %v417
    %v421 = vadd.f32 %v399, %v420
    %s422 = sld [smem:[#allocation9 + $0x28]]
    %v423 = vstv %s422
    %v424 = vmul.f32 %v423, %v417
    %v425 = vadd.f32 %v403, %v424
    %s426 = sld [smem:[#allocation7 + $0x20]]
    %s427 = sld [smem:[#allocation7 + $0x21]]
    %v428 = vstv %s426
    %v429 = vsub.f32 %v71, %v428
    %v430 = vand.u32 2147483647, %v429
    %v431 = vstv %s427
    %v432 = vsub.f32 %v73, %v431
    %v433 = vand.u32 2147483647, %v432
    %v434 = vadd.f32 %v430, %v433
    %v435 = vmul.f32 %v434, %v434
    %v436 = vadd.f32 %v434, 1e-06
    %v437 = vlog2.pop %v436
    %v438 = vmul.f32 %v437, 0.6931472
    %v439 = vmul.f32 %v435, %v438
    %s440 = sld [smem:[#allocation9 + $0x10]]
    %v441 = vstv %s440
    %v442 = vmul.f32 %v441, %v439
    %v443 = vadd.f32 %v421, %v442
    %s444 = sld [smem:[#allocation9 + $0x29]]
    %v445 = vstv %s444
    %v446 = vmul.f32 %v445, %v439
    %v447 = vadd.f32 %v425, %v446
    %s448 = sld [smem:[#allocation7 + $0x22]]
    %s449 = sld [smem:[#allocation7 + $0x23]]
    %v450 = vstv %s448
    %v451 = vsub.f32 %v71, %v450
    %v452 = vand.u32 2147483647, %v451
    %v453 = vstv %s449
    %v454 = vsub.f32 %v73, %v453
    %v455 = vand.u32 2147483647, %v454
    %v456 = vadd.f32 %v452, %v455
    %v457 = vmul.f32 %v456, %v456
    %v458 = vadd.f32 %v456, 1e-06
    %v459 = vlog2.pop %v458
    %v460 = vmul.f32 %v459, 0.6931472
    %v461 = vmul.f32 %v457, %v460
    %s462 = sld [smem:[#allocation9 + $0x11]]
    %v463 = vstv %s462
    %v464 = vmul.f32 %v463, %v461
    %v465 = vadd.f32 %v443, %v464
    %s466 = sld [smem:[#allocation9 + $0x2a]]
    %v467 = vstv %s466
    %v468 = vmul.f32 %v467, %v461
    %v469 = vadd.f32 %v447, %v468
    %s470 = sld [smem:[#allocation7 + $0x24]]
    %s471 = sld [smem:[#allocation7 + $0x25]]
    %v472 = vstv %s470
    %v473 = vsub.f32 %v71, %v472
    %v474 = vand.u32 2147483647, %v473
    %v475 = vstv %s471
    %v476 = vsub.f32 %v73, %v475
    %v477 = vand.u32 2147483647, %v476
    %v478 = vadd.f32 %v474, %v477
    %v479 = vmul.f32 %v478, %v478
    %v480 = vadd.f32 %v478, 1e-06
    %v481 = vlog2.pop %v480
    %v482 = vmul.f32 %v481, 0.6931472
    %v483 = vmul.f32 %v479, %v482
    %s484 = sld [smem:[#allocation9 + $0x12]]
    %v485 = vstv %s484
    %v486 = vmul.f32 %v485, %v483
    %v487 = vadd.f32 %v465, %v486
    %s488 = sld [smem:[#allocation9 + $0x2b]]
    %v489 = vstv %s488
    %v490 = vmul.f32 %v489, %v483
    %v491 = vadd.f32 %v469, %v490
    %s492 = sld [smem:[#allocation7 + $0x26]]
    %s493 = sld [smem:[#allocation7 + $0x27]]
    %v494 = vstv %s492
    %v495 = vsub.f32 %v71, %v494
    %v496 = vand.u32 2147483647, %v495
    %v497 = vstv %s493
    %v498 = vsub.f32 %v73, %v497
    %v499 = vand.u32 2147483647, %v498
    %v500 = vadd.f32 %v496, %v499
    %v501 = vmul.f32 %v500, %v500
    %v502 = vadd.f32 %v500, 1e-06
    %v503 = vlog2.pop %v502
    %v504 = vmul.f32 %v503, 0.6931472
    %v505 = vmul.f32 %v501, %v504
    %s506 = sld [smem:[#allocation9 + $0x13]]
    %v507 = vstv %s506
    %v508 = vmul.f32 %v507, %v505
    %v509 = vadd.f32 %v487, %v508
    %s510 = sld [smem:[#allocation9 + $0x2c]]
    %v511 = vstv %s510
    %v512 = vmul.f32 %v511, %v505
    %v513 = vadd.f32 %v491, %v512
    %s514 = sld [smem:[#allocation7 + $0x28]]
    %s515 = sld [smem:[#allocation7 + $0x29]]
    %v516 = vstv %s514
    %v517 = vsub.f32 %v71, %v516
    %v518 = vand.u32 2147483647, %v517
    %v519 = vstv %s515
    %v520 = vsub.f32 %v73, %v519
    %v521 = vand.u32 2147483647, %v520
    %v522 = vadd.f32 %v518, %v521
    %v523 = vmul.f32 %v522, %v522
    %v524 = vadd.f32 %v522, 1e-06
    %v525 = vlog2.pop %v524
    %v526 = vmul.f32 %v525, 0.6931472
    %v527 = vmul.f32 %v523, %v526
    %s528 = sld [smem:[#allocation9 + $0x14]]
    %v529 = vstv %s528
    %v530 = vmul.f32 %v529, %v527
    %v531 = vadd.f32 %v509, %v530
    %s532 = sld [smem:[#allocation9 + $0x2d]]
    %v533 = vstv %s532
    %v534 = vmul.f32 %v533, %v527
    %v535 = vadd.f32 %v513, %v534
    %s536 = sld [smem:[#allocation7 + $0x2a]]
    %s537 = sld [smem:[#allocation7 + $0x2b]]
    %v538 = vstv %s536
    %v539 = vsub.f32 %v71, %v538
    %v540 = vand.u32 2147483647, %v539
    %v541 = vstv %s537
    %v542 = vsub.f32 %v73, %v541
    %v543 = vand.u32 2147483647, %v542
    %v544 = vadd.f32 %v540, %v543
    %v545 = vmul.f32 %v544, %v544
    %v546 = vadd.f32 %v544, 1e-06
    %v547 = vlog2.pop %v546
    %v548 = vmul.f32 %v547, 0.6931472
    %v549 = vmul.f32 %v545, %v548
    %s550 = sld [smem:[#allocation9 + $0x15]]
    %v551 = vstv %s550
    %v552 = vmul.f32 %v551, %v549
    %v553 = vadd.f32 %v531, %v552
    %s554 = sld [smem:[#allocation9 + $0x2e]]
    %v555 = vstv %s554
    %v556 = vmul.f32 %v555, %v549
    %v557 = vadd.f32 %v535, %v556
    %s558 = sld [smem:[#allocation7 + $0x2c]]
    %s559 = sld [smem:[#allocation7 + $0x2d]]
    %v560 = vstv %s558
    %v561 = vsub.f32 %v71, %v560
    %v562 = vand.u32 2147483647, %v561
    %v563 = vstv %s559
    %v564 = vsub.f32 %v73, %v563
    %v565 = vand.u32 2147483647, %v564
    %v566 = vadd.f32 %v562, %v565
    %v567 = vmul.f32 %v566, %v566
    %v568 = vadd.f32 %v566, 1e-06
    %v569 = vlog2.pop %v568
    %v570 = vmul.f32 %v569, 0.6931472
    %v571 = vmul.f32 %v567, %v570
    %s572 = sld [smem:[#allocation9 + $0x16]]
    %v573 = vstv %s572
    %v574 = vmul.f32 %v573, %v571
    %v575 = vadd.f32 %v553, %v574
    %s576 = sld [smem:[#allocation9 + $0x2f]]
    %v577 = vstv %s576
    %v578 = vmul.f32 %v577, %v571
    %v579 = vadd.f32 %v557, %v578
    %s580 = sld [smem:[#allocation7 + $0x2e]]
    %s581 = sld [smem:[#allocation7 + $0x2f]]
    %v582 = vstv %s580
    %v583 = vsub.f32 %v71, %v582
    %v584 = vand.u32 2147483647, %v583
    %v585 = vstv %s581
    %v586 = vsub.f32 %v73, %v585
    %v587 = vand.u32 2147483647, %v586
    %v588 = vadd.f32 %v584, %v587
    %v589 = vmul.f32 %v588, %v588
    %v590 = vadd.f32 %v588, 1e-06
    %v591 = vlog2.pop %v590
    %v592 = vmul.f32 %v591, 0.6931472
    %v593 = vmul.f32 %v589, %v592
    %s594 = sld [smem:[#allocation9 + $0x17]]
    %v595 = vstv %s594
    %v596 = vmul.f32 %v595, %v593
    %v597 = vadd.f32 %v575, %v596
    %s598 = sld [smem:[#allocation9 + $0x30]]
    %v599 = vstv %s598
    %v600 = vmul.f32 %v599, %v593
    %v601 = vadd.f32 %v579, %v600
    %s602 = sld [smem:[#allocation7 + $0x30]]
    %s603 = sld [smem:[#allocation7 + $0x31]]
    %v604 = vstv %s602
    %v605 = vsub.f32 %v71, %v604
    %v606 = vand.u32 2147483647, %v605
    %v607 = vstv %s603
    %v608 = vsub.f32 %v73, %v607
    %v609 = vand.u32 2147483647, %v608
    %v610 = vadd.f32 %v606, %v609
    %v611 = vmul.f32 %v610, %v610
    %v612 = vadd.f32 %v610, 1e-06
    %v613 = vlog2.pop %v612
    %v614 = vmul.f32 %v613, 0.6931472
    %v615 = vmul.f32 %v611, %v614
    %s616 = sld [smem:[#allocation9 + $0x18]]
    %v617 = vstv %s616
    %v618 = vmul.f32 %v617, %v615
    %v619 = vadd.f32 %v597, %v618
    %s620 = sld [smem:[#allocation9 + $0x31]]
    %v621 = vstv %s620
    %v622 = vmul.f32 %v621, %v615
    %v623 = vadd.f32 %v601, %v622
    %s624 = sld [smem:[#allocation2]]
    %s625 = sld [smem:[#allocation2 + $0x1]]
    %s626 = sld [smem:[#allocation2 + $0x2]]
    %s627 = sld [smem:[#allocation2 + $0x3]]
    %s628 = sld [smem:[#allocation2 + $0x4]]
    %s629 = sld [smem:[#allocation2 + $0x5]]
    %v630 = vstv %s624
    %v631 = vmul.f32 %v630, %v71
    %v632 = vstv %s625
    %v633 = vmul.f32 %v632, %v73
    %v634 = vadd.f32 %v631, %v633
    %v635 = vstv %s626
    %v636 = vadd.f32 %v634, %v635
    %v637 = vadd.f32 %v636, %v619
    %638 = vst [vmem:[#allocation11] sm:$0x3] %v637
    %v639 = vstv %s627
    %v640 = vmul.f32 %v639, %v71
    %v641 = vstv %s628
    %v642 = vmul.f32 %v641, %v73
    %v643 = vadd.f32 %v640, %v642
    %v644 = vstv %s629
    %v645 = vadd.f32 %v643, %v644
    %v646 = vadd.f32 %v645, %v619
    %s647 = scalar_lea.vmem [#allocation11], 2
    %648 = vst [vmem:[%s647] sm:$0x3] %v646
    %s649 = sld [smem:[#allocation2 + $0x6]]
    %s650 = sld [smem:[#allocation2 + $0x7]]
    %s651 = sld [smem:[#allocation2 + $0x8]]
    %s652 = sld [smem:[#allocation2 + $0x9]]
    %s653 = sld [smem:[#allocation2 + $0xa]]
    %s654 = sld [smem:[#allocation2 + $0xb]]
    %v655 = vstv %s649
    %v656 = vmul.f32 %v655, %v71
    %v657 = vstv %s650
    %v658 = vmul.f32 %v657, %v73
    %v659 = vadd.f32 %v656, %v658
    %v660 = vstv %s651
    %v661 = vadd.f32 %v659, %v660
    %v662 = vadd.f32 %v661, %v623
    %s663 = scalar_lea.vmem [#allocation11], 4
    %664 = vst [vmem:[%s663] sm:$0x3] %v662
    %v665 = vstv %s652
    %v666 = vmul.f32 %v665, %v71
    %v667 = vstv %s653
    %v668 = vmul.f32 %v667, %v73
    %v669 = vadd.f32 %v666, %v668
    %v670 = vstv %s654
    %v671 = vadd.f32 %v669, %v670
    %v672 = vadd.f32 %v671, %v623
    %s673 = scalar_lea.vmem [#allocation11], 6
    %674 = vst [vmem:[%s673] sm:$0x3] %v672
    // Predicated region
    $region34: #{tpu_custom_call.1} parent=1 // pred_check
      _
    $region35: #{tpu_custom_call.1} parent=1 // pred_check_branch
      %676 = sbr.rel (0) target = $region37
    $region36: #{tpu_custom_call.1} parent=1 // pred_region
      %678 = vsyncadd [#allocation4], 0
      %s679 = sshll.u32 [#allocation11], 4
      %s680 = int_to_ptr.vmem [resolvable:$true] %s679
      %s681 = sshll.u32 %s4, 4
      %s682 = int_to_ptr.hbm [resolvable:$true] %s681
      %687 = dma.vmem_to_hbm [thread:$0]  %s680, 128, %s682, [#allocation4], 32, 32, 2
    $region37: #{tpu_custom_call.1} parent=1 // pred_fallthru
      _
    // Predicated region
    $region38: #{tpu_custom_call.1} parent=1 // pred_check
      _
    $region39: #{tpu_custom_call.1} parent=1 // pred_check_branch
      %689 = sbr.rel (0) target = $region41
    $region40: #{tpu_custom_call.1} parent=1 // pred_region
      %691 = dma.done [#allocation4], 128
    $region41: #{tpu_custom_call.1} parent=1 // pred_fallthru
      _
    %692 = vsyncpa [#allocation3], 1
    %693 = vsyncpa [#allocation4], 1
    %694 = vsyncpa [#allocation5], 1
    %695 = vsyncpa [#allocation8], 1
    %696 = vsyncpa [#allocation6], 1

</llo_original>
